<compile_context>
chip_gen: v7x
topology: tpu7x:2x2x1
jax: 0.10.0
libtpu: 0.0.40
codegen_flags: <defaults>
</compile_context>

<pallas_src>
import numpy as np

import jax
import jax.numpy as jnp
from jax.experimental import pallas as pl
from jax.experimental.pallas import tpu as pltpu

# ----------------------------- model sizes ---------------------------------
EMBEDDING_SIZE = 32        # ref_input_size
REF_FEATURE_SIZE = 8
ENTROPY_FEATURE_SIZE = 16
HIDDEN = 32                # inner_layer_units = (HIDDEN, HIDDEN) for every net

# ----------------------- packed-parameter geometry --------------------------
KX = 64                    # padded input lane width fed to the kernel
NW = 2 * HIDDEN            # 64: fused hidden / fused output lane width
SEG = 64                   # rows per weight segment in the packed slab
N_SEG = 7                  # W1A, W2A, W3A, W1B_x, W1B_y, W2B, W3B
W_ROWS = N_SEG * SEG       # 448
N_BIAS_ROWS = 8            # b1A, b2A, b3A, b1B, w1B_t, b2B, b3B, (spare)

# raw torch input lane order (kept — no wrapper-side reorder):
TEMP_COL = 0
ENTROPY_COL = 1
EMB_COL = 2
X_COLS = 2 + EMBEDDING_SIZE          # 34

BATCH = 256
MAX_BLOCK_ROWS = 1024


# ------------------------------- kernel ------------------------------------
def model0_kernel(x_ref, w_ref, b_ref, out_ref):
    R = REF_FEATURE_SIZE

    x = x_ref[...]                               # [tb, 64] f32 (lanes 34:64 are 0)
    xb = x.astype(jnp.bfloat16)                  # single cast, MXU operands only

    b = b_ref[...]                               # [8, 64] f32
    b1a, b2a, b3a = b[0:1], b[1:2], b[2:3]
    b1b, w1b_t, b2b, b3b = b[3:4], b[4:5], b[5:6], b[6:7]

    def seg(k):                                  # static, tile-aligned row slice
        return w_ref[k * SEG:(k + 1) * SEG, :]   # [64, 64] bf16

    def mm(lhs_bf16, k):
        return jnp.dot(lhs_bf16, seg(k), preferred_element_type=jnp.float32)

    # ---- stage A: ref_parameter_net ⊕ entropy_feature_net (block-diag) ----
    h = jnp.maximum(mm(xb, 0) + b1a, 0.0)
    h = jnp.maximum(mm(h.astype(jnp.bfloat16), 1) + b2a, 0.0)
    ya = mm(h.astype(jnp.bfloat16), 2) + b3a     # [tb, 64] f32
    # ya lanes: [0:R)=p_ref, [R]=temperature0, [R+1:R+1+F)=x_entropy, rest 0

    temperature = x[:, TEMP_COL:TEMP_COL + 1]    # [tb, 1] f32
    t0 = ya[:, R:R + 1]                          # [tb, 1] f32
    t_scaled = temperature / t0                  # exact f32 division (accuracy)

    # ---- stage B: ref_feature_net ⊕ parameter_net (block-diag, no concat) --
    h = (mm(xb, 3)                               # embedding -> parameter_net
         + mm(ya.astype(jnp.bfloat16), 4)        # p_ref     -> parameter_net
         + t_scaled * w1b_t                      # t/t0      -> ref_feature_net
         + b1b)
    h = jnp.maximum(h, 0.0)
    h = jnp.maximum(mm(h.astype(jnp.bfloat16), 5) + b2b, 0.0)
    yb = mm(h.astype(jnp.bfloat16), 6) + b3b     # [tb, 64] f32
    # yb lanes: [0:R)=x_ref, [R]=0, [R+1:R+1+F)=p_entropy, rest 0

    # sum(p_ref*x_ref) + t0*0 + sum(x_entropy*p_entropy) = v_ref + v_entropy.
    # Lane-dense writeback: transpose (XLU) then sublane-reduce -> [1, tb].
    prod = ya * yb                               # [tb, 64] f32
    out_ref[...] = jnp.sum(jnp.transpose(prod), axis=0, keepdims=True)


# ------------------------------ wrapper -------------------------------------
def _round_up(x, m):
    return (x + m - 1) // m * m


def _tensorcores_per_chip():
    """How many TensorCores share one device (megacore sharding targets)."""
    try:
        kind = jax.devices()[0].device_kind.lower()
    except Exception:
        return 1
    if any(s in kind for s in ("v5e", "v5 lite", "v5litepod", "v6e", "v6 lite",
                               "v2", "v3")):
        return 1
    # v4 / v5p / v7x style: two TensorCores behind one device.
    return 2


def _choose_tile(batch, n_cores, max_rows=MAX_BLOCK_ROWS):
    """Pick batch tile so single-TC chips get one grid step and multi-TC chips
    get one tile per core; grow the tile (not the grid) as batch grows."""
    bp = _round_up(batch, 8)
    if n_cores > 1 and bp > 128:
        tb = _round_up((bp + n_cores - 1) // n_cores, 128)
    else:
        tb = bp
    tb = min(tb, max_rows)
    if tb < bp:                      # multi-step grid: keep lane-dense out blocks
        tb = _round_up(tb, 128)
        bp = _round_up(bp, tb)
    return tb, bp


def model0_ci_norm_forward(x_in, w_packed, b_packed, *, max_block_rows=MAX_BLOCK_ROWS):
    """x_in: [B, 2 + E] = [temperature, entropy, embedding] (raw torch layout)."""
    B, C = x_in.shape
    assert C == X_COLS, (C, X_COLS)

    n_cores = _tensorcores_per_chip()
    tb, Bp = _choose_tile(B, n_cores, max_block_rows)

    # Single wrapper-side op: pad batch rows to Bp and features 34 -> 64 lanes.
    # Weight packing uses the raw torch column order, so no reorder/concat.
    x = jnp.pad(x_in.astype(jnp.float32), ((0, Bp - B), (0, KX - C)))

    grid = (Bp // tb,)
    out = pl.pallas_call(
        model0_kernel,
        out_shape=jax.ShapeDtypeStruct((1, Bp), jnp.float32),
        grid=grid,
        in_specs=[
            pl.BlockSpec((tb, KX), lambda i: (i, 0)),              # batch tile
            pl.BlockSpec((W_ROWS, NW), lambda i: (0, 0)),          # VMEM-resident
            pl.BlockSpec((N_BIAS_ROWS, NW), lambda i: (0, 0)),     # VMEM-resident
        ],
        out_specs=pl.BlockSpec((1, tb), lambda i: (0, i)),         # lane-dense
        compiler_params=pltpu.CompilerParams(
            dimension_semantics=("parallel",)),
        cost_estimate=pl.CostEstimate(
            flops=2 * Bp * N_SEG * NW * NW,
            transcendentals=0,
            bytes_accessed=(Bp * KX * 4 + W_ROWS * NW * 2
                            + N_BIAS_ROWS * NW * 4 + Bp * 4),
        ),
    )(x, w_packed, b_packed)
    return out.reshape(Bp, 1)[:B]


# -------------------------- parameter construction --------------------------
def _init_linear(key, fan_in, fan_out):
    kw, kb = jax.random.split(key)
    scale = 1.0 / jnp.sqrt(jnp.float32(fan_in))
    w = jax.random.normal(kw, (fan_in, fan_out), jnp.float32) * scale
    b = jax.random.normal(kb, (1, fan_out), jnp.float32) * 0.1
    return w, b


def build_params(key):
    E, R, F, H = EMBEDDING_SIZE, REF_FEATURE_SIZE, ENTROPY_FEATURE_SIZE, HIDDEN
    net_dims = [
        [(E, H), (H, H), (H, R + 1)],        # ref_parameter_net
        [(1, H), (H, H), (H, R)],            # ref_feature_net
        [(E + R, H), (H, H), (H, F)],        # parameter_net
        [(1, H), (H, H), (H, F)],            # entropy_feature_net
    ]
    params = []
    for net in net_dims:
        for (fi, fo) in net:
            key, sub = jax.random.split(key)
            w, b = _init_linear(sub, fi, fo)
            params.extend([w, b])
    return tuple(params)


def pack_params(params):
    """Pack the 24 torch-style (w:[in,out], b:[1,out]) arrays into the fused,
    block-diagonal, lane-dense slabs consumed by the kernel. Layer-1 weight
    rows follow the raw torch input column order [temp, entropy, embedding]."""
    p = [np.asarray(a, np.float32) for a in params]
    (rpw1, rpb1, rpw2, rpb2, rpw3, rpb3,
     rfw1, rfb1, rfw2, rfb2, rfw3, rfb3,
     pw1, pb1, pw2, pb2, pw3, pb3,
     ew1, eb1, ew2, eb2, ew3, eb3) = p
    E, R, F, H = EMBEDDING_SIZE, REF_FEATURE_SIZE, ENTROPY_FEATURE_SIZE, HIDDEN

    W = np.zeros((W_ROWS, NW), np.float32)
    B = np.zeros((N_BIAS_ROWS, NW), np.float32)

    # stage A, layer 1: rows = raw x lanes, cols = [rp hidden | entropy hidden]
    W[0 * SEG + EMB_COL:0 * SEG + EMB_COL + E, 0:H] = rpw1
    W[0 * SEG + ENTROPY_COL, H:2 * H] = ew1[0]
    B[0, 0:H], B[0, H:2 * H] = rpb1[0], eb1[0]
    # stage A, layer 2: block-diagonal
    W[1 * SEG:1 * SEG + H, 0:H] = rpw2
    W[1 * SEG + H:1 * SEG + 2 * H, H:2 * H] = ew2
    B[1, 0:H], B[1, H:2 * H] = rpb2[0], eb2[0]
    # stage A, layer 3: outputs [p_ref | t0 | x_entropy | 0]
    W[2 * SEG:2 * SEG + H, 0:R + 1] = rpw3
    W[2 * SEG + H:2 * SEG + 2 * H, R + 1:R + 1 + F] = ew3
    B[2, 0:R + 1], B[2, R + 1:R + 1 + F] = rpb3[0], eb3[0]
    # stage B, layer 1 (x part): embedding lanes -> parameter_net hidden
    W[3 * SEG + EMB_COL:3 * SEG + EMB_COL + E, H:2 * H] = pw1[:E]
    # stage B, layer 1 (yA part): p_ref lanes -> parameter_net hidden
    W[4 * SEG:4 * SEG + R, H:2 * H] = pw1[E:]
    # stage B, layer 1: t/t0 broadcast row + biases
    B[4, 0:H] = rfw1[0]
    B[3, 0:H], B[3, H:2 * H] = rfb1[0], pb1[0]
    # stage B, layer 2: block-diagonal
    W[5 * SEG:5 * SEG + H, 0:H] = rfw2
    W[5 * SEG + H:5 * SEG + 2 * H, H:2 * H] = pw2
    B[5, 0:H], B[5, H:2 * H] = rfb2[0], pb2[0]
    # stage B, layer 3: outputs [x_ref | 0 | p_entropy | 0]
    W[6 * SEG:6 * SEG + H, 0:R] = rfw3
    W[6 * SEG + H:6 * SEG + 2 * H, R + 1:R + 1 + F] = pw3
    B[6, 0:R], B[6, R + 1:R + 1 + F] = rfb3[0], pb3[0]

    return jnp.asarray(W, jnp.bfloat16), jnp.asarray(B, jnp.float32)


# ---------------------------- pure-JAX reference -----------------------------
def reference_forward(x_in, params):
    (rpw1, rpb1, rpw2, rpb2, rpw3, rpb3,
     rfw1, rfb1, rfw2, rfb2, rfw3, rfb3,
     pw1, pb1, pw2, pb2, pw3, pb3,
     ew1, eb1, ew2, eb2, ew3, eb3) = params
    t = x_in[:, 0:1]
    s = x_in[:, 1:2]
    emb = x_in[:, 2:]

    def mlp(h, w1, b1, w2, b2, w3, b3):
        h = jnp.maximum(h @ w1 + b1, 0.0)
        h = jnp.maximum(h @ w2 + b2, 0.0)
        return h @ w3 + b3

    rp = mlp(emb, rpw1, rpb1, rpw2, rpb2, rpw3, rpb3)
    p_ref = rp[:, :REF_FEATURE_SIZE]
    t0 = rp[:, REF_FEATURE_SIZE:REF_FEATURE_SIZE + 1]
    x_ref = mlp(t / t0, rfw1, rfb1, rfw2, rfb2, rfw3, rfb3)
    p_in = jnp.concatenate([emb, p_ref], axis=1)
    p_entropy = mlp(p_in, pw1, pb1, pw2, pb2, pw3, pb3)
    x_entropy = mlp(s, ew1, eb1, ew2, eb2, ew3, eb3)
    v_entropy = jnp.sum(p_entropy * x_entropy, axis=1)
    v_ref = jnp.sum(p_ref * x_ref, axis=1)
    return (v_entropy + v_ref)[:, None]


# --------------------------------- main --------------------------------------
if __name__ == "__main__":
    key = jax.random.PRNGKey(0)
    k_x, k_p = jax.random.split(key)

    # x_in = [temperature, entropy, embedding]; temperature kept positive.
    x_in = jax.random.normal(k_x, (BATCH, 2 + EMBEDDING_SIZE), jnp.float32)
    x_in = x_in.at[:, 0].set(jnp.abs(x_in[:, 0]) + 1.0)

    params = list(build_params(k_p))
    # Test-data conditioning only: temperature0 is a network output used as a
    # divisor; keep it well away from zero so the bf16-MXU kernel and the f32
    # reference are both well-conditioned.
    params[5] = params[5].at[0, REF_FEATURE_SIZE].add(2.0)
    params = tuple(params)

    w_packed, b_packed = pack_params(params)

    out = model0_ci_norm_forward(x_in, w_packed, b_packed)
    out = jax.block_until_ready(out)

    ref = reference_forward(x_in, params)
    assert out.shape == (BATCH, 1), out.shape
    # Kernel uses bf16 MXU operands (f32 accumulation, exact f32 division), so
    # validate per-element error against the overall f32 output scale.
    scale = float(jnp.maximum(jnp.max(jnp.abs(ref)), 1.0))
    max_err = float(jnp.max(jnp.abs(out - ref)))
    assert max_err <= 5e-2 * scale, (max_err, scale)

    print("KERNEL_OK")
</pallas_src>

<mosaic_0001>
module attributes {stable_mosaic.version = 11 : i64} {
  func.func @model0_kernel(%arg0: i32, %arg1: memref<128x64xf32, #tpu.memory_space<vmem>>, %arg2: memref<448x64xbf16, #tpu.memory_space<vmem>>, %arg3: memref<8x64xf32, #tpu.memory_space<vmem>>, %arg4: memref<1x128xf32, #tpu.memory_space<vmem>>) attributes {dimension_semantics = [#tpu.dimension_semantics<parallel>], iteration_bounds = array<i64: 2>, scalar_prefetch = 0 : i64, scratch_operands = 0 : i64, tpu.core_type = #tpu.core_type<tc>, window_params = [{transform_indices = @transform_0, window_bounds = array<i64: 128, 64>}, {pipeline_mode = #tpu.pipeline_mode<synchronous>, transform_indices = @transform_1, window_bounds = array<i64: 448, 64>}, {pipeline_mode = #tpu.pipeline_mode<synchronous>, transform_indices = @transform_2, window_bounds = array<i64: 8, 64>}, {transform_indices = @transform_3, window_bounds = array<i64: 1, 128>}]} {
    %c0 = arith.constant 0 : index
    %c0_0 = arith.constant 0 : index
    %0 = vector.load %arg1[%c0, %c0_0] : memref<128x64xf32, #tpu.memory_space<vmem>>, vector<128x64xf32>
    %1 = arith.truncf %0 : vector<128x64xf32> to vector<128x64xbf16>
    %c0_1 = arith.constant 0 : index
    %c0_2 = arith.constant 0 : index
    %2 = vector.load %arg3[%c0_1, %c0_2] : memref<8x64xf32, #tpu.memory_space<vmem>>, vector<8x64xf32>
    %3 = vector.extract_strided_slice %2 {offsets = [0, 0], sizes = [1, 64], strides = [1, 1]} : vector<8x64xf32> to vector<1x64xf32>
    %4 = vector.extract_strided_slice %2 {offsets = [1, 0], sizes = [1, 64], strides = [1, 1]} : vector<8x64xf32> to vector<1x64xf32>
    %5 = vector.extract_strided_slice %2 {offsets = [2, 0], sizes = [1, 64], strides = [1, 1]} : vector<8x64xf32> to vector<1x64xf32>
    %6 = vector.extract_strided_slice %2 {offsets = [3, 0], sizes = [1, 64], strides = [1, 1]} : vector<8x64xf32> to vector<1x64xf32>
    %7 = vector.extract_strided_slice %2 {offsets = [4, 0], sizes = [1, 64], strides = [1, 1]} : vector<8x64xf32> to vector<1x64xf32>
    %8 = vector.extract_strided_slice %2 {offsets = [5, 0], sizes = [1, 64], strides = [1, 1]} : vector<8x64xf32> to vector<1x64xf32>
    %9 = vector.extract_strided_slice %2 {offsets = [6, 0], sizes = [1, 64], strides = [1, 1]} : vector<8x64xf32> to vector<1x64xf32>
    %c0_3 = arith.constant 0 : index
    %c0_4 = arith.constant 0 : index
    %10 = vector.load %arg2[%c0_3, %c0_4] : memref<448x64xbf16, #tpu.memory_space<vmem>>, vector<64x64xbf16>
    %cst = arith.constant dense<0.000000e+00> : vector<128x64xf32>
    %11 = tpu.matmul %1, %10, %cst {dimension_numbers = #tpu.dot_dimension_numbers<[1], [0], [0], [1], [0, 0, 1, 1], [], []>} : vector<128x64xbf16>, vector<64x64xbf16>, vector<128x64xf32> -> vector<128x64xf32>
    %12 = vector.broadcast %3 : vector<1x64xf32> to vector<128x64xf32>
    %13 = arith.addf %11, %12 : vector<128x64xf32>
    %cst_5 = arith.constant 0.000000e+00 : f32
    %14 = vector.broadcast %cst_5 : f32 to vector<128x64xf32>
    %15 = arith.maximumf %13, %14 : vector<128x64xf32>
    %16 = arith.truncf %15 : vector<128x64xf32> to vector<128x64xbf16>
    %c64 = arith.constant 64 : index
    %c0_6 = arith.constant 0 : index
    %17 = vector.load %arg2[%c64, %c0_6] : memref<448x64xbf16, #tpu.memory_space<vmem>>, vector<64x64xbf16>
    %cst_7 = arith.constant dense<0.000000e+00> : vector<128x64xf32>
    %18 = tpu.matmul %16, %17, %cst_7 {dimension_numbers = #tpu.dot_dimension_numbers<[1], [0], [0], [1], [0, 0, 1, 1], [], []>} : vector<128x64xbf16>, vector<64x64xbf16>, vector<128x64xf32> -> vector<128x64xf32>
    %19 = vector.broadcast %4 : vector<1x64xf32> to vector<128x64xf32>
    %20 = arith.addf %18, %19 : vector<128x64xf32>
    %cst_8 = arith.constant 0.000000e+00 : f32
    %21 = vector.broadcast %cst_8 : f32 to vector<128x64xf32>
    %22 = arith.maximumf %20, %21 : vector<128x64xf32>
    %23 = arith.truncf %22 : vector<128x64xf32> to vector<128x64xbf16>
    %c128 = arith.constant 128 : index
    %c0_9 = arith.constant 0 : index
    %24 = vector.load %arg2[%c128, %c0_9] : memref<448x64xbf16, #tpu.memory_space<vmem>>, vector<64x64xbf16>
    %cst_10 = arith.constant dense<0.000000e+00> : vector<128x64xf32>
    %25 = tpu.matmul %23, %24, %cst_10 {dimension_numbers = #tpu.dot_dimension_numbers<[1], [0], [0], [1], [0, 0, 1, 1], [], []>} : vector<128x64xbf16>, vector<64x64xbf16>, vector<128x64xf32> -> vector<128x64xf32>
    %26 = vector.broadcast %5 : vector<1x64xf32> to vector<128x64xf32>
    %27 = arith.addf %25, %26 : vector<128x64xf32>
    %28 = vector.extract_strided_slice %0 {offsets = [0, 0], sizes = [128, 1], strides = [1, 1]} : vector<128x64xf32> to vector<128x1xf32>
    %29 = vector.extract_strided_slice %27 {offsets = [0, 8], sizes = [128, 1], strides = [1, 1]} : vector<128x64xf32> to vector<128x1xf32>
    %30 = arith.divf %28, %29 : vector<128x1xf32>
    %c192 = arith.constant 192 : index
    %c0_11 = arith.constant 0 : index
    %31 = vector.load %arg2[%c192, %c0_11] : memref<448x64xbf16, #tpu.memory_space<vmem>>, vector<64x64xbf16>
    %cst_12 = arith.constant dense<0.000000e+00> : vector<128x64xf32>
    %32 = tpu.matmul %1, %31, %cst_12 {dimension_numbers = #tpu.dot_dimension_numbers<[1], [0], [0], [1], [0, 0, 1, 1], [], []>} : vector<128x64xbf16>, vector<64x64xbf16>, vector<128x64xf32> -> vector<128x64xf32>
    %33 = arith.truncf %27 : vector<128x64xf32> to vector<128x64xbf16>
    %c256 = arith.constant 256 : index
    %c0_13 = arith.constant 0 : index
    %34 = vector.load %arg2[%c256, %c0_13] : memref<448x64xbf16, #tpu.memory_space<vmem>>, vector<64x64xbf16>
    %cst_14 = arith.constant dense<0.000000e+00> : vector<128x64xf32>
    %35 = tpu.matmul %33, %34, %cst_14 {dimension_numbers = #tpu.dot_dimension_numbers<[1], [0], [0], [1], [0, 0, 1, 1], [], []>} : vector<128x64xbf16>, vector<64x64xbf16>, vector<128x64xf32> -> vector<128x64xf32>
    %36 = arith.addf %32, %35 : vector<128x64xf32>
    %37 = vector.broadcast %30 : vector<128x1xf32> to vector<128x64xf32>
    %38 = vector.broadcast %7 : vector<1x64xf32> to vector<128x64xf32>
    %39 = arith.mulf %37, %38 : vector<128x64xf32>
    %40 = arith.addf %36, %39 : vector<128x64xf32>
    %41 = vector.broadcast %6 : vector<1x64xf32> to vector<128x64xf32>
    %42 = arith.addf %40, %41 : vector<128x64xf32>
    %cst_15 = arith.constant 0.000000e+00 : f32
    %43 = vector.broadcast %cst_15 : f32 to vector<128x64xf32>
    %44 = arith.maximumf %42, %43 : vector<128x64xf32>
    %45 = arith.truncf %44 : vector<128x64xf32> to vector<128x64xbf16>
    %c320 = arith.constant 320 : index
    %c0_16 = arith.constant 0 : index
    %46 = vector.load %arg2[%c320, %c0_16] : memref<448x64xbf16, #tpu.memory_space<vmem>>, vector<64x64xbf16>
    %cst_17 = arith.constant dense<0.000000e+00> : vector<128x64xf32>
    %47 = tpu.matmul %45, %46, %cst_17 {dimension_numbers = #tpu.dot_dimension_numbers<[1], [0], [0], [1], [0, 0, 1, 1], [], []>} : vector<128x64xbf16>, vector<64x64xbf16>, vector<128x64xf32> -> vector<128x64xf32>
    %48 = vector.broadcast %8 : vector<1x64xf32> to vector<128x64xf32>
    %49 = arith.addf %47, %48 : vector<128x64xf32>
    %cst_18 = arith.constant 0.000000e+00 : f32
    %50 = vector.broadcast %cst_18 : f32 to vector<128x64xf32>
    %51 = arith.maximumf %49, %50 : vector<128x64xf32>
    %52 = arith.truncf %51 : vector<128x64xf32> to vector<128x64xbf16>
    %c384 = arith.constant 384 : index
    %c0_19 = arith.constant 0 : index
    %53 = vector.load %arg2[%c384, %c0_19] : memref<448x64xbf16, #tpu.memory_space<vmem>>, vector<64x64xbf16>
    %cst_20 = arith.constant dense<0.000000e+00> : vector<128x64xf32>
    %54 = tpu.matmul %52, %53, %cst_20 {dimension_numbers = #tpu.dot_dimension_numbers<[1], [0], [0], [1], [0, 0, 1, 1], [], []>} : vector<128x64xbf16>, vector<64x64xbf16>, vector<128x64xf32> -> vector<128x64xf32>
    %55 = vector.broadcast %9 : vector<1x64xf32> to vector<128x64xf32>
    %56 = arith.addf %54, %55 : vector<128x64xf32>
    %57 = arith.mulf %27, %56 : vector<128x64xf32>
    %58 = tpu.transpose %57, [1, 0] : vector<128x64xf32> -> vector<64x128xf32>
    %cst_21 = arith.constant dense<0.000000e+00> : vector<128xf32>
    %59 = vector.multi_reduction <add>, %58, %cst_21 [0] : vector<64x128xf32> to vector<128xf32>
    %60 = vector.shape_cast %59 : vector<128xf32> to vector<1x128xf32>
    %c0_22 = arith.constant 0 : index
    %c0_23 = arith.constant 0 : index
    %61 = vector.load %arg4[%c0_22, %c0_23] : memref<1x128xf32, #tpu.memory_space<vmem>>, vector<1x128xf32>
    tpu.vector_store %arg4[%c0_22, %c0_23], %60 {strides = array<i32>} : memref<1x128xf32, #tpu.memory_space<vmem>>, vector<1x128xf32>,
    return
  }
  func.func @transform_0(%arg0: i32) -> (i32, i32) {
    %c0_i32 = arith.constant 0 : i32
    %c0_i32_0 = arith.constant 0 : i32
    return %arg0, %c0_i32 : i32, i32
  }
  func.func @transform_1(%arg0: i32) -> (i32, i32) {
    %c0_i32 = arith.constant 0 : i32
    %c0_i32_0 = arith.constant 0 : i32
    %c0_i32_1 = arith.constant 0 : i32
    return %c0_i32, %c0_i32_0 : i32, i32
  }
  func.func @transform_2(%arg0: i32) -> (i32, i32) {
    %c0_i32 = arith.constant 0 : i32
    %c0_i32_0 = arith.constant 0 : i32
    %c0_i32_1 = arith.constant 0 : i32
    return %c0_i32, %c0_i32_0 : i32, i32
  }
  func.func @transform_3(%arg0: i32) -> (i32, i32) {
    %c0_i32 = arith.constant 0 : i32
    %c0_i32_0 = arith.constant 0 : i32
    return %c0_i32, %arg0 : i32, i32
  }
}

</mosaic_0001>

<llo_original>
// kernel: tpu_custom_call.1
$region0: #{tpu_custom_call.1}
  #allocation0 [shape = 'u32[]', space=smem, size = 0x4, offset = 0x4, fixed_abs, tag = 'smem constant byte address 0x4 - core index']
  #allocation1 [shape = 'u32[144,128]{1,0:T(1,128)}', space=vmem, size = 0x12000, scoped, tag = 'internal scratch']
  %s0 = inlined_call_operand.vmem [shape: f32[256,64], index: 0, kind: input, shape index: {}]
  %s1 = inlined_call_operand.vmem [shape: bf16[448,64], index: 1, kind: input, shape index: {}]
  %s2 = inlined_call_operand.vmem [shape: f32[8,64], index: 2, kind: input, shape index: {}]
  %s3 = inlined_call_operand.hbm [shape: f32[1,256], index: 3, kind: output, shape index: {}]
  %s4 = sld [smem:[#allocation0]]
  $region45: #{tpu_custom_call.1} parent=0
    _
  %s6 = ssub.s32 1, %s4
  %s7 = scalar_select 0, %s6, %s4
  $region1: #{tpu_custom_call.1} parent=0
    #allocation2 [shape = 'u8[1024]{0}', space=vmem, size = 0x400, scoped, tag = 'output window, operand 0']
    #allocation3 [shape = 's32[2]{0}', space=sflag, size = 0x8, scoped, tag = 'scoped memory for tpu_custom_call.1']
    %8 = vsyncpa [#allocation3], 0
    %s9 = scalar_lea.sflag [#allocation3], 1
    %10 = vsyncpa %s9, 0
    loop: start=0, step=1, limit=4
    $region2: #{tpu_custom_call.1} parent=1 // loop_pre_header
      _
    $region3: #{tpu_custom_call.1} parent=1 // loop_header
      %s12 = sphi 0, %s16
      %p13 = scmp.ge.s32.totalorder %s12, 4
      %s22 = sphi 0, %s24
      %s25 = sphi 0, %s22
      %s26 = sphi 0, %s25
      %s42 = sphi 0, %s26
      %s46 = sphi 0, %s46
      %s48 = sphi 0, %s46
      %s49 = sphi 0, %s48
      %s63 = sphi 0, %s49
      %s67 = sphi 0, %s67
      %s69 = sphi 0, %s67
      %s70 = sphi 0, %s69
      %s84 = sphi 0, %s70
      %s90 = sphi 0, %s92
      %s93 = sphi 0, %s90
      %s94 = sphi 0, %s93
      %s110 = sphi 0, %s94
    $region4: #{tpu_custom_call.1} parent=1 // loop_header_branch
      %15 = sbr.rel (%p13) target = $region8
    $region5: #{tpu_custom_call.1} parent=1 // loop_body
      %s17 = ssub.s32 %s12, 1
      %s18 = ssub.s32 %s12, 2
      %s19 = sadd.s32 %s12, 1
      %s20 = ssub.s32 %s12, %s19
      %p21 = scmp.eq.s32.totalorder %s20, 0
      %s23 = sadd.s32 %s22, 1
      %s24 = scalar_select %p21, %s22, %s23
      %p27 = pneg %p21
      %p28 = scmp.eq.s32.totalorder %s12, 1
      %p29 = por %p27, %p28
      %p30 = scmp.ne.s32.totalorder %s22, %s25
      %p31 = scmp.eq.s32.totalorder %s12, 0
      %p32 = por %p30, %p31
      %p33 = scmp.ne.s32.totalorder %s22, %s25
      %p34 = scmp.eq.s32.totalorder %s17, 1
      %p35 = por %p33, %p34
      %p36 = scmp.ne.s32.totalorder %s25, %s26
      %p37 = scmp.eq.s32.totalorder %s17, 0
      %p38 = por %p36, %p37
      %p39 = scmp.ne.s32.totalorder %s25, %s26
      %p40 = scmp.eq.s32.totalorder %s18, 1
      %p41 = por %p39, %p40
      %p43 = scmp.ne.s32.totalorder %s26, %s42
      %p44 = scmp.eq.s32.totalorder %s18, 0
      %p45 = por %p43, %p44
      %s47 = sadd.s32 %s46, 1
      %p50 = scmp.eq.s32.totalorder %s12, 1
      %p51 = scmp.ne.s32.totalorder %s46, %s48
      %p52 = scmp.eq.s32.totalorder %s12, 0
      %p53 = por %p51, %p52
      %p54 = scmp.ne.s32.totalorder %s46, %s48
      %p55 = scmp.eq.s32.totalorder %s17, 1
      %p56 = por %p54, %p55
      %p57 = scmp.ne.s32.totalorder %s48, %s49
      %p58 = scmp.eq.s32.totalorder %s17, 0
      %p59 = por %p57, %p58
      %p60 = scmp.ne.s32.totalorder %s48, %s49
      %p61 = scmp.eq.s32.totalorder %s18, 1
      %p62 = por %p60, %p61
      %p64 = scmp.ne.s32.totalorder %s49, %s63
      %p65 = scmp.eq.s32.totalorder %s18, 0
      %p66 = por %p64, %p65
      %s68 = sadd.s32 %s67, 1
      %p71 = scmp.eq.s32.totalorder %s12, 1
      %p72 = scmp.ne.s32.totalorder %s67, %s69
      %p73 = scmp.eq.s32.totalorder %s12, 0
      %p74 = por %p72, %p73
      %p75 = scmp.ne.s32.totalorder %s67, %s69
      %p76 = scmp.eq.s32.totalorder %s17, 1
      %p77 = por %p75, %p76
      %p78 = scmp.ne.s32.totalorder %s69, %s70
      %p79 = scmp.eq.s32.totalorder %s17, 0
      %p80 = por %p78, %p79
      %p81 = scmp.ne.s32.totalorder %s69, %s70
      %p82 = scmp.eq.s32.totalorder %s18, 1
      %p83 = por %p81, %p82
      %p85 = scmp.ne.s32.totalorder %s70, %s84
      %p86 = scmp.eq.s32.totalorder %s18, 0
      %p87 = por %p85, %p86
      %s88 = ssub.s32 %s12, %s19
      %p89 = scmp.eq.s32.totalorder %s88, 0
      %s91 = sadd.s32 %s90, 1
      %s92 = scalar_select %p89, %s90, %s91
      %p95 = pneg %p89
      %p96 = scmp.eq.s32.totalorder %s12, 1
      %p97 = por %p95, %p96
      %p98 = scmp.ne.s32.totalorder %s90, %s93
      %p99 = scmp.eq.s32.totalorder %s12, 0
      %p100 = por %p98, %p99
      %p101 = scmp.ne.s32.totalorder %s90, %s93
      %p102 = scmp.eq.s32.totalorder %s17, 1
      %p103 = por %p101, %p102
      %p104 = scmp.ne.s32.totalorder %s93, %s94
      %p105 = scmp.eq.s32.totalorder %s17, 0
      %p106 = por %p104, %p105
      %p107 = scmp.ne.s32.totalorder %s93, %s94
      %p108 = scmp.eq.s32.totalorder %s18, 1
      %p109 = por %p107, %p108
      %p111 = scmp.ne.s32.totalorder %s94, %s110
      %p112 = scmp.eq.s32.totalorder %s18, 0
      %p113 = por %p111, %p112
      %p114 = scmp.le.s32.totalorder 1, %s12
      %p115 = scmp.lt.s32.totalorder %s12, 3
      %p116 = pnand %p114, %p115
      %p117 = pneg %p116
      // Predicated region
      $region9: #{tpu_custom_call.1} parent=5 // pred_check
        _
      $region10: #{tpu_custom_call.1} parent=5 // pred_check_branch
        %119 = sbr.rel (%p116) target = $region12
      $region11: #{tpu_custom_call.1} parent=5 // pred_region
        %s120 = ssub.s32 %s12, 1
        // Predicated region
        $region13: #{tpu_custom_call.1} parent=11 // pred_check
          %p121 = pneg %p59
        $region14: #{tpu_custom_call.1} parent=11 // pred_check_branch
          %123 = sbr.rel (%p121) target = $region16
        $region15: #{tpu_custom_call.1} parent=11 // pred_region
          _
        $region16: #{tpu_custom_call.1} parent=11 // pred_fallthru
          _
        // Predicated region
        $region17: #{tpu_custom_call.1} parent=11 // pred_check
          %p124 = pneg %p80
        $region18: #{tpu_custom_call.1} parent=11 // pred_check_branch
          %126 = sbr.rel (%p124) target = $region20
        $region19: #{tpu_custom_call.1} parent=11 // pred_region
          _
        $region20: #{tpu_custom_call.1} parent=11 // pred_fallthru
          _
      $region12: #{tpu_custom_call.1} parent=5 // pred_fallthru
        _
      %p127 = scmp.lt.s32.totalorder %s12, 2
      // Predicated region
      $region21: #{tpu_custom_call.1} parent=5 // pred_check
        %p128 = pneg %p127
      $region22: #{tpu_custom_call.1} parent=5 // pred_check_branch
        %130 = sbr.rel (%p128) target = $region24
      $region23: #{tpu_custom_call.1} parent=5 // pred_region
        // Predicated region
        $region25: #{tpu_custom_call.1} parent=23 // pred_check
          %p131 = pneg %p32
        $region26: #{tpu_custom_call.1} parent=23 // pred_check_branch
          %133 = sbr.rel (%p131) target = $region28
        $region27: #{tpu_custom_call.1} parent=23 // pred_region
          %s134 = smul.u32 16, %s12
          %p135 = scmp.lt.s32.totalorder %s134, 31
          %s136 = scalar_select %p135, %s134, 31
          %s137 = smul.addr %s136, 8
          %s138 = scalar_lea.vmem %s0, %s137
          %s139 = smul.u32 16, %s12
        $region28: #{tpu_custom_call.1} parent=23 // pred_fallthru
          _
      $region24: #{tpu_custom_call.1} parent=5 // pred_fallthru
        _
      %p140 = scmp.le.s32.totalorder 1, %s12
      %p141 = scmp.lt.s32.totalorder %s12, 3
      %p142 = pnand %p140, %p141
      %p143 = pneg %p142
      // Predicated region
      $region29: #{tpu_custom_call.1} parent=5 // pred_check
        _
      $region30: #{tpu_custom_call.1} parent=5 // pred_check_branch
        %145 = sbr.rel (%p142) target = $region32
      $region31: #{tpu_custom_call.1} parent=5 // pred_region
        %s146 = ssub.s32 %s12, 1
        %s147 = smul.u32 16, %s17
        %p148 = scmp.lt.s32.totalorder %s147, 31
        %s149 = scalar_select %p148, %s147, 31
        %s150 = smul.addr %s149, 8
        %s151 = scalar_lea.vmem %s0, %s150
        %p152 = pneg %p38
        %p153 = pneg %p35
        %p154 = pneg %p59
        %p155 = pneg %p56
        %p156 = pneg %p80
        %p157 = pneg %p77
        %p158 = pneg %p106
        %p159 = pneg %p103
        %s160 = sand.u32 %s93, 1
        %s161 = scalar_lea.sflag [#allocation3], %s160
        %s162 = sand.u32 %s93, 1
        %s163 = scalar_lea.vmem [#allocation2], %s162
        %s164 = smul.u32 16, %s17
        %p165 = scmp.lt.s32.totalorder %s164, 31
        %s166 = scalar_select %p165, %s164, 31
        %s167 = smul.addr %s166, 8
        %s168 = scalar_lea.vmem %s0, %s167
        %s169 = smul.u32 16, %s17
        %v171 = vld [vmem:[%s168] sm:$0xff]
        %v172 = vld [vmem:[%s168 + $0x8] sm:$0xff]
        %v173 = vld [vmem:[%s168 + $0x10] sm:$0xff]
        %v174 = vld [vmem:[%s168 + $0x18] sm:$0xff]
        %v175 = vld [vmem:[%s168 + $0x20] sm:$0xff]
        %v176 = vld [vmem:[%s168 + $0x28] sm:$0xff]
        %v177 = vld [vmem:[%s168 + $0x30] sm:$0xff]
        %v178 = vld [vmem:[%s168 + $0x38] sm:$0xff]
        %v179 = vld [vmem:[%s168 + $0x40] sm:$0xff]
        %v180 = vld [vmem:[%s168 + $0x48] sm:$0xff]
        %v181 = vld [vmem:[%s168 + $0x50] sm:$0xff]
        %v182 = vld [vmem:[%s168 + $0x58] sm:$0xff]
        %v183 = vld [vmem:[%s168 + $0x60] sm:$0xff]
        %v184 = vld [vmem:[%s168 + $0x68] sm:$0xff]
        %v185 = vld [vmem:[%s168 + $0x70] sm:$0xff]
        %v186 = vld [vmem:[%s168 + $0x78] sm:$0xff]
        %v187 = vpack.c.bf16 %v172, %v171
        %v188 = vpack.c.bf16 %v174, %v173
        %v189 = vpack.c.bf16 %v176, %v175
        %v190 = vpack.c.bf16 %v178, %v177
        %v191 = vpack.c.bf16 %v180, %v179
        %v192 = vpack.c.bf16 %v182, %v181
        %v193 = vpack.c.bf16 %v184, %v183
        %v194 = vpack.c.bf16 %v186, %v185
        %v195 = vld [vmem:[%s2] sm:$0xff]
        %v196 = vld [vmem:[%s1] sm:$0xf]
        %v197 = vld [vmem:[%s1 + $0x4] sm:$0xf]
        %v198 = vld [vmem:[%s1 + $0x8] sm:$0xf]
        %v199 = vld [vmem:[%s1 + $0xc] sm:$0xf]
        %v200 = vld [vmem:[%s1 + $0x10] sm:$0xf]
        %v201 = vld [vmem:[%s1 + $0x14] sm:$0xf]
        %v202 = vld [vmem:[%s1 + $0x18] sm:$0xf]
        %v203 = vld [vmem:[%s1 + $0x1c] sm:$0xf]
        %v204 = vlaneseq
        %v205 = vshrl.u32 %v204, 7
        %v206 = vsub.s32 0, %v205
        %v207 = vrot.slane %v195, %v206
        %v216 = vunpack.c.l.b16 %v196
        %v217 = vunpack.c.l.b16 %v197
        %v218 = vunpack.c.l.b16 %v198
        %v219 = vunpack.c.l.b16 %v199
        %v220 = vunpack.c.l.b16 %v200
        %v221 = vunpack.c.l.b16 %v201
        %v222 = vunpack.c.l.b16 %v202
        %v223 = vunpack.c.l.b16 %v203
        %v224 = vpack.c.b16 %v217, %v216
        %v225 = vpack.c.b16 %v219, %v218
        %v226 = vpack.c.b16 %v221, %v220
        %v227 = vpack.c.b16 %v223, %v222
        %vm232 = vcmask 523264
        %v234 = vsel %vm232, %v187, 0
        %v237 = vsel %vm232, %v188, 0
        %v240 = vsel %vm232, %v189, 0
        %v243 = vsel %vm232, %v190, 0
        %v246 = vsel %vm232, %v191, 0
        %v249 = vsel %vm232, %v192, 0
        %v252 = vsel %vm232, %v193, 0
        %v255 = vsel %vm232, %v194, 0
        %257 = vmatprep.subr.bf16.mxu0 0
        %258 = vmatpush1.bf16.msra.mxu0 %v224
        %259 = vmatprep.subr.bf16.mxu0 0
        %260 = vmatpush1.bf16.msra.mxu0 %v225
        %261 = vmatprep.subr.bf16.mxu0 0
        %262 = vmatpush1.bf16.msra.mxu0 %v226
        %263 = vmatprep.subr.bf16.mxu0 0
        %264 = vmatpush1.bf16.msra.mxu0 %v227
        %265 = vmatprep.subr.bf16.mxu0 0
        %266 = vmatpush1.bf16.msra.mxu0 0
        %267 = vmatprep.subr.bf16.mxu0 0
        %268 = vmatpush1.bf16.msra.mxu0 0
        %269 = vmatprep.subr.bf16.mxu0 0
        %270 = vmatpush1.bf16.msra.mxu0 0
        %271 = vmatprep.subr.bf16.mxu0 0
        %272 = vmatpush1.bf16.msra.mxu0 0
        %273 = vmatprep.subr.bf16.mxu0 0
        %274 = vmatpush1.bf16.msra.mxu0 0
        %275 = vmatprep.subr.bf16.mxu0 0
        %276 = vmatpush1.bf16.msra.mxu0 0
        %277 = vmatprep.subr.bf16.mxu0 0
        %278 = vmatpush1.bf16.msra.mxu0 0
        %279 = vmatprep.subr.bf16.mxu0 0
        %280 = vmatpush1.bf16.msra.mxu0 0
        %281 = vmatprep.subr.bf16.mxu0 0
        %282 = vmatpush1.bf16.msra.mxu0 0
        %283 = vmatprep.subr.bf16.mxu0 0
        %284 = vmatpush1.bf16.msra.mxu0 0
        %285 = vmatprep.subr.bf16.mxu0 0
        %286 = vmatpush1.bf16.msra.mxu0 0
        %287 = vmatprep.subr.bf16.mxu0 0
        %288 = vmatpush1.bf16.msra.mxu0 0
        %289 = vmatprep.mubr.bf16.mxu0 0
        %290 = vmatmul.mubr.bf16.gmra.mrb[0].mxu0 %v234
        %v291 = vpop.f32.mrb[0].mxu0
        %v292 = vadd.f32 %v207, %v291
        %v293 = vpop.f32.mrb[0].mxu0
        %v294 = vpop.f32.mrb[0].mxu0
        %v295 = vadd.f32 %v207, %v294
        %v296 = vpop.f32.mrb[0].mxu0
        %297 = vmatprep.mubr.bf16.mxu0 0
        %298 = vmatmul.mubr.bf16.gmra.mrb[0].mxu0 %v237
        %v299 = vpop.f32.mrb[0].mxu0
        %v300 = vadd.f32 %v207, %v299
        %v301 = vpop.f32.mrb[0].mxu0
        %v302 = vpop.f32.mrb[0].mxu0
        %v303 = vadd.f32 %v207, %v302
        %v304 = vpop.f32.mrb[0].mxu0
        %305 = vmatprep.mubr.bf16.mxu0 0
        %306 = vmatmul.mubr.bf16.gmra.mrb[0].mxu0 %v240
        %v307 = vpop.f32.mrb[0].mxu0
        %v308 = vadd.f32 %v207, %v307
        %v309 = vpop.f32.mrb[0].mxu0
        %v310 = vpop.f32.mrb[0].mxu0
        %v311 = vadd.f32 %v207, %v310
        %v312 = vpop.f32.mrb[0].mxu0
        %313 = vmatprep.mubr.bf16.mxu0 0
        %314 = vmatmul.mubr.bf16.gmra.mrb[0].mxu0 %v243
        %v315 = vpop.f32.mrb[0].mxu0
        %v316 = vadd.f32 %v207, %v315
        %v317 = vpop.f32.mrb[0].mxu0
        %v318 = vpop.f32.mrb[0].mxu0
        %v319 = vadd.f32 %v207, %v318
        %v320 = vpop.f32.mrb[0].mxu0
        %321 = vmatprep.mubr.bf16.mxu0 0
        %322 = vmatmul.mubr.bf16.gmra.mrb[0].mxu0 %v246
        %v323 = vpop.f32.mrb[0].mxu0
        %v324 = vadd.f32 %v207, %v323
        %v325 = vpop.f32.mrb[0].mxu0
        %v326 = vpop.f32.mrb[0].mxu0
        %v327 = vadd.f32 %v207, %v326
        %v328 = vpop.f32.mrb[0].mxu0
        %329 = vmatprep.mubr.bf16.mxu0 0
        %330 = vmatmul.mubr.bf16.gmra.mrb[0].mxu0 %v249
        %v331 = vpop.f32.mrb[0].mxu0
        %v332 = vadd.f32 %v207, %v331
        %v333 = vpop.f32.mrb[0].mxu0
        %v334 = vpop.f32.mrb[0].mxu0
        %v335 = vadd.f32 %v207, %v334
        %v336 = vpop.f32.mrb[0].mxu0
        %337 = vmatprep.mubr.bf16.mxu0 0
        %338 = vmatmul.mubr.bf16.gmra.mrb[0].mxu0 %v252
        %v339 = vpop.f32.mrb[0].mxu0
        %v340 = vadd.f32 %v207, %v339
        %v341 = vpop.f32.mrb[0].mxu0
        %v342 = vpop.f32.mrb[0].mxu0
        %v343 = vadd.f32 %v207, %v342
        %v344 = vpop.f32.mrb[0].mxu0
        %345 = vmatprep.mubr.bf16.mxu0 0
        %346 = vmatmul.mubr.bf16.gmra.mrb[0].mxu0 %v255
        %v347 = vpop.f32.mrb[0].mxu0
        %v348 = vadd.f32 %v207, %v347
        %v349 = vpop.f32.mrb[0].mxu0
        %v350 = vpop.f32.mrb[0].mxu0
        %v351 = vadd.f32 %v207, %v350
        %v352 = vpop.f32.mrb[0].mxu0
        %353 = vdwg.mxu0
        %v354 = vmax.f32 %v292, 0.0
        %v355 = vmax.f32 %v295, 0.0
        %v356 = vmax.f32 %v300, 0.0
        %v357 = vmax.f32 %v303, 0.0
        %v358 = vmax.f32 %v308, 0.0
        %v359 = vmax.f32 %v311, 0.0
        %v360 = vmax.f32 %v316, 0.0
        %v361 = vmax.f32 %v319, 0.0
        %v362 = vmax.f32 %v324, 0.0
        %v363 = vmax.f32 %v327, 0.0
        %v364 = vmax.f32 %v332, 0.0
        %v365 = vmax.f32 %v335, 0.0
        %v366 = vmax.f32 %v340, 0.0
        %v367 = vmax.f32 %v343, 0.0
        %v368 = vmax.f32 %v348, 0.0
        %v369 = vmax.f32 %v351, 0.0
        %v370 = vpack.c.bf16 %v355, %v354
        %v371 = vpack.c.bf16 %v357, %v356
        %v372 = vpack.c.bf16 %v359, %v358
        %v373 = vpack.c.bf16 %v361, %v360
        %v374 = vpack.c.bf16 %v363, %v362
        %v375 = vpack.c.bf16 %v365, %v364
        %v376 = vpack.c.bf16 %v367, %v366
        %v377 = vpack.c.bf16 %v369, %v368
        %v378 = vld [vmem:[%s1 + $0x20] sm:$0xf]
        %v379 = vld [vmem:[%s1 + $0x24] sm:$0xf]
        %v380 = vld [vmem:[%s1 + $0x28] sm:$0xf]
        %v381 = vld [vmem:[%s1 + $0x2c] sm:$0xf]
        %v382 = vld [vmem:[%s1 + $0x30] sm:$0xf]
        %v383 = vld [vmem:[%s1 + $0x34] sm:$0xf]
        %v384 = vld [vmem:[%s1 + $0x38] sm:$0xf]
        %v385 = vld [vmem:[%s1 + $0x3c] sm:$0xf]
        %v386 = vlaneseq
        %v387 = vshrl.u32 %v386, 7
        %v388 = vsub.s32 1, %v387
        %v389 = vrot.slane %v195, %v388
        %v398 = vunpack.c.l.b16 %v378
        %v399 = vunpack.c.l.b16 %v379
        %v400 = vunpack.c.l.b16 %v380
        %v401 = vunpack.c.l.b16 %v381
        %v402 = vunpack.c.l.b16 %v382
        %v403 = vunpack.c.l.b16 %v383
        %v404 = vunpack.c.l.b16 %v384
        %v405 = vunpack.c.l.b16 %v385
        %v406 = vpack.c.b16 %v399, %v398
        %v407 = vpack.c.b16 %v401, %v400
        %v408 = vpack.c.b16 %v403, %v402
        %v409 = vpack.c.b16 %v405, %v404
        %v415 = vsel %vm232, %v370, 0
        %v418 = vsel %vm232, %v371, 0
        %v421 = vsel %vm232, %v372, 0
        %v424 = vsel %vm232, %v373, 0
        %v427 = vsel %vm232, %v374, 0
        %v430 = vsel %vm232, %v375, 0
        %v433 = vsel %vm232, %v376, 0
        %v436 = vsel %vm232, %v377, 0
        %438 = vmatprep.subr.bf16.mxu0 0
        %439 = vmatpush1.bf16.msra.mxu0 %v406
        %440 = vmatprep.subr.bf16.mxu0 0
        %441 = vmatpush1.bf16.msra.mxu0 %v407
        %442 = vmatprep.subr.bf16.mxu0 0
        %443 = vmatpush1.bf16.msra.mxu0 %v408
        %444 = vmatprep.subr.bf16.mxu0 0
        %445 = vmatpush1.bf16.msra.mxu0 %v409
        %446 = vmatprep.subr.bf16.mxu0 0
        %447 = vmatpush1.bf16.msra.mxu0 0
        %448 = vmatprep.subr.bf16.mxu0 0
        %449 = vmatpush1.bf16.msra.mxu0 0
        %450 = vmatprep.subr.bf16.mxu0 0
        %451 = vmatpush1.bf16.msra.mxu0 0
        %452 = vmatprep.subr.bf16.mxu0 0
        %453 = vmatpush1.bf16.msra.mxu0 0
        %454 = vmatprep.subr.bf16.mxu0 0
        %455 = vmatpush1.bf16.msra.mxu0 0
        %456 = vmatprep.subr.bf16.mxu0 0
        %457 = vmatpush1.bf16.msra.mxu0 0
        %458 = vmatprep.subr.bf16.mxu0 0
        %459 = vmatpush1.bf16.msra.mxu0 0
        %460 = vmatprep.subr.bf16.mxu0 0
        %461 = vmatpush1.bf16.msra.mxu0 0
        %462 = vmatprep.subr.bf16.mxu0 0
        %463 = vmatpush1.bf16.msra.mxu0 0
        %464 = vmatprep.subr.bf16.mxu0 0
        %465 = vmatpush1.bf16.msra.mxu0 0
        %466 = vmatprep.subr.bf16.mxu0 0
        %467 = vmatpush1.bf16.msra.mxu0 0
        %468 = vmatprep.subr.bf16.mxu0 0
        %469 = vmatpush1.bf16.msra.mxu0 0
        %470 = vmatprep.mubr.bf16.mxu0 0
        %471 = vmatmul.mubr.bf16.gmra.mrb[0].mxu0 %v415
        %v472 = vpop.f32.mrb[0].mxu0
        %v473 = vadd.f32 %v389, %v472
        %v474 = vpop.f32.mrb[0].mxu0
        %v475 = vpop.f32.mrb[0].mxu0
        %v476 = vadd.f32 %v389, %v475
        %v477 = vpop.f32.mrb[0].mxu0
        %478 = vmatprep.mubr.bf16.mxu0 0
        %479 = vmatmul.mubr.bf16.gmra.mrb[0].mxu0 %v418
        %v480 = vpop.f32.mrb[0].mxu0
        %v481 = vadd.f32 %v389, %v480
        %v482 = vpop.f32.mrb[0].mxu0
        %v483 = vpop.f32.mrb[0].mxu0
        %v484 = vadd.f32 %v389, %v483
        %v485 = vpop.f32.mrb[0].mxu0
        %486 = vmatprep.mubr.bf16.mxu0 0
        %487 = vmatmul.mubr.bf16.gmra.mrb[0].mxu0 %v421
        %v488 = vpop.f32.mrb[0].mxu0
        %v489 = vadd.f32 %v389, %v488
        %v490 = vpop.f32.mrb[0].mxu0
        %v491 = vpop.f32.mrb[0].mxu0
        %v492 = vadd.f32 %v389, %v491
        %v493 = vpop.f32.mrb[0].mxu0
        %494 = vmatprep.mubr.bf16.mxu0 0
        %495 = vmatmul.mubr.bf16.gmra.mrb[0].mxu0 %v424
        %v496 = vpop.f32.mrb[0].mxu0
        %v497 = vadd.f32 %v389, %v496
        %v498 = vpop.f32.mrb[0].mxu0
        %v499 = vpop.f32.mrb[0].mxu0
        %v500 = vadd.f32 %v389, %v499
        %v501 = vpop.f32.mrb[0].mxu0
        %502 = vmatprep.mubr.bf16.mxu0 0
        %503 = vmatmul.mubr.bf16.gmra.mrb[0].mxu0 %v427
        %v504 = vpop.f32.mrb[0].mxu0
        %v505 = vadd.f32 %v389, %v504
        %v506 = vpop.f32.mrb[0].mxu0
        %v507 = vpop.f32.mrb[0].mxu0
        %v508 = vadd.f32 %v389, %v507
        %v509 = vpop.f32.mrb[0].mxu0
        %510 = vmatprep.mubr.bf16.mxu0 0
        %511 = vmatmul.mubr.bf16.gmra.mrb[0].mxu0 %v430
        %v512 = vpop.f32.mrb[0].mxu0
        %v513 = vadd.f32 %v389, %v512
        %v514 = vpop.f32.mrb[0].mxu0
        %v515 = vpop.f32.mrb[0].mxu0
        %v516 = vadd.f32 %v389, %v515
        %v517 = vpop.f32.mrb[0].mxu0
        %518 = vmatprep.mubr.bf16.mxu0 0
        %519 = vmatmul.mubr.bf16.gmra.mrb[0].mxu0 %v433
        %v520 = vpop.f32.mrb[0].mxu0
        %v521 = vadd.f32 %v389, %v520
        %v522 = vpop.f32.mrb[0].mxu0
        %v523 = vpop.f32.mrb[0].mxu0
        %v524 = vadd.f32 %v389, %v523
        %v525 = vpop.f32.mrb[0].mxu0
        %526 = vmatprep.mubr.bf16.mxu0 0
        %527 = vmatmul.mubr.bf16.gmra.mrb[0].mxu0 %v436
        %v528 = vpop.f32.mrb[0].mxu0
        %v529 = vadd.f32 %v389, %v528
        %v530 = vpop.f32.mrb[0].mxu0
        %v531 = vpop.f32.mrb[0].mxu0
        %v532 = vadd.f32 %v389, %v531
        %v533 = vpop.f32.mrb[0].mxu0
        %534 = vdwg.mxu0
        %v535 = vmax.f32 %v473, 0.0
        %v536 = vmax.f32 %v476, 0.0
        %v537 = vmax.f32 %v481, 0.0
        %v538 = vmax.f32 %v484, 0.0
        %v539 = vmax.f32 %v489, 0.0
        %v540 = vmax.f32 %v492, 0.0
        %v541 = vmax.f32 %v497, 0.0
        %v542 = vmax.f32 %v500, 0.0
        %v543 = vmax.f32 %v505, 0.0
        %v544 = vmax.f32 %v508, 0.0
        %v545 = vmax.f32 %v513, 0.0
        %v546 = vmax.f32 %v516, 0.0
        %v547 = vmax.f32 %v521, 0.0
        %v548 = vmax.f32 %v524, 0.0
        %v549 = vmax.f32 %v529, 0.0
        %v550 = vmax.f32 %v532, 0.0
        %v551 = vpack.c.bf16 %v536, %v535
        %v552 = vpack.c.bf16 %v538, %v537
        %v553 = vpack.c.bf16 %v540, %v539
        %v554 = vpack.c.bf16 %v542, %v541
        %v555 = vpack.c.bf16 %v544, %v543
        %v556 = vpack.c.bf16 %v546, %v545
        %v557 = vpack.c.bf16 %v548, %v547
        %v558 = vpack.c.bf16 %v550, %v549
        %v559 = vld [vmem:[%s1 + $0x40] sm:$0xf]
        %v560 = vld [vmem:[%s1 + $0x44] sm:$0xf]
        %v561 = vld [vmem:[%s1 + $0x48] sm:$0xf]
        %v562 = vld [vmem:[%s1 + $0x4c] sm:$0xf]
        %v563 = vld [vmem:[%s1 + $0x50] sm:$0xf]
        %v564 = vld [vmem:[%s1 + $0x54] sm:$0xf]
        %v565 = vld [vmem:[%s1 + $0x58] sm:$0xf]
        %v566 = vld [vmem:[%s1 + $0x5c] sm:$0xf]
        %v567 = vlaneseq
        %v568 = vshrl.u32 %v567, 7
        %v569 = vsub.s32 2, %v568
        %v570 = vrot.slane %v195, %v569
        %v579 = vunpack.c.l.b16 %v559
        %v580 = vunpack.c.l.b16 %v560
        %v581 = vunpack.c.l.b16 %v561
        %v582 = vunpack.c.l.b16 %v562
        %v583 = vunpack.c.l.b16 %v563
        %v584 = vunpack.c.l.b16 %v564
        %v585 = vunpack.c.l.b16 %v565
        %v586 = vunpack.c.l.b16 %v566
        %v587 = vpack.c.b16 %v580, %v579
        %v588 = vpack.c.b16 %v582, %v581
        %v589 = vpack.c.b16 %v584, %v583
        %v590 = vpack.c.b16 %v586, %v585
        %v596 = vsel %vm232, %v551, 0
        %v599 = vsel %vm232, %v552, 0
        %v602 = vsel %vm232, %v553, 0
        %v605 = vsel %vm232, %v554, 0
        %v608 = vsel %vm232, %v555, 0
        %v611 = vsel %vm232, %v556, 0
        %v614 = vsel %vm232, %v557, 0
        %v617 = vsel %vm232, %v558, 0
        %619 = vmatprep.subr.bf16.mxu0 0
        %620 = vmatpush1.bf16.msra.mxu0 %v587
        %621 = vmatprep.subr.bf16.mxu0 0
        %622 = vmatpush1.bf16.msra.mxu0 %v588
        %623 = vmatprep.subr.bf16.mxu0 0
        %624 = vmatpush1.bf16.msra.mxu0 %v589
        %625 = vmatprep.subr.bf16.mxu0 0
        %626 = vmatpush1.bf16.msra.mxu0 %v590
        %627 = vmatprep.subr.bf16.mxu0 0
        %628 = vmatpush1.bf16.msra.mxu0 0
        %629 = vmatprep.subr.bf16.mxu0 0
        %630 = vmatpush1.bf16.msra.mxu0 0
        %631 = vmatprep.subr.bf16.mxu0 0
        %632 = vmatpush1.bf16.msra.mxu0 0
        %633 = vmatprep.subr.bf16.mxu0 0
        %634 = vmatpush1.bf16.msra.mxu0 0
        %635 = vmatprep.subr.bf16.mxu0 0
        %636 = vmatpush1.bf16.msra.mxu0 0
        %637 = vmatprep.subr.bf16.mxu0 0
        %638 = vmatpush1.bf16.msra.mxu0 0
        %639 = vmatprep.subr.bf16.mxu0 0
        %640 = vmatpush1.bf16.msra.mxu0 0
        %641 = vmatprep.subr.bf16.mxu0 0
        %642 = vmatpush1.bf16.msra.mxu0 0
        %643 = vmatprep.subr.bf16.mxu0 0
        %644 = vmatpush1.bf16.msra.mxu0 0
        %645 = vmatprep.subr.bf16.mxu0 0
        %646 = vmatpush1.bf16.msra.mxu0 0
        %647 = vmatprep.subr.bf16.mxu0 0
        %648 = vmatpush1.bf16.msra.mxu0 0
        %649 = vmatprep.subr.bf16.mxu0 0
        %650 = vmatpush1.bf16.msra.mxu0 0
        %651 = vmatprep.mubr.bf16.mxu0 0
        %652 = vmatmul.mubr.bf16.gmra.mrb[0].mxu0 %v596
        %v653 = vpop.f32.mrb[0].mxu0
        %v654 = vadd.f32 %v570, %v653
        %v655 = vpop.f32.mrb[0].mxu0
        %v656 = vpop.f32.mrb[0].mxu0
        %v657 = vadd.f32 %v570, %v656
        %v658 = vpop.f32.mrb[0].mxu0
        %659 = vmatprep.mubr.bf16.mxu0 0
        %660 = vmatmul.mubr.bf16.gmra.mrb[0].mxu0 %v599
        %v661 = vpop.f32.mrb[0].mxu0
        %v662 = vadd.f32 %v570, %v661
        %v663 = vpop.f32.mrb[0].mxu0
        %v664 = vpop.f32.mrb[0].mxu0
        %v665 = vadd.f32 %v570, %v664
        %v666 = vpop.f32.mrb[0].mxu0
        %667 = vmatprep.mubr.bf16.mxu0 0
        %668 = vmatmul.mubr.bf16.gmra.mrb[0].mxu0 %v602
        %v669 = vpop.f32.mrb[0].mxu0
        %v670 = vadd.f32 %v570, %v669
        %v671 = vpop.f32.mrb[0].mxu0
        %v672 = vpop.f32.mrb[0].mxu0
        %v673 = vadd.f32 %v570, %v672
        %v674 = vpop.f32.mrb[0].mxu0
        %675 = vmatprep.mubr.bf16.mxu0 0
        %676 = vmatmul.mubr.bf16.gmra.mrb[0].mxu0 %v605
        %v677 = vpop.f32.mrb[0].mxu0
        %v678 = vadd.f32 %v570, %v677
        %v679 = vpop.f32.mrb[0].mxu0
        %v680 = vpop.f32.mrb[0].mxu0
        %v681 = vadd.f32 %v570, %v680
        %v682 = vpop.f32.mrb[0].mxu0
        %683 = vmatprep.mubr.bf16.mxu0 0
        %684 = vmatmul.mubr.bf16.gmra.mrb[0].mxu0 %v608
        %v685 = vpop.f32.mrb[0].mxu0
        %v686 = vadd.f32 %v570, %v685
        %v687 = vpop.f32.mrb[0].mxu0
        %v688 = vpop.f32.mrb[0].mxu0
        %v689 = vadd.f32 %v570, %v688
        %v690 = vpop.f32.mrb[0].mxu0
        %691 = vmatprep.mubr.bf16.mxu0 0
        %692 = vmatmul.mubr.bf16.gmra.mrb[0].mxu0 %v611
        %v693 = vpop.f32.mrb[0].mxu0
        %v694 = vadd.f32 %v570, %v693
        %v695 = vpop.f32.mrb[0].mxu0
        %v696 = vpop.f32.mrb[0].mxu0
        %v697 = vadd.f32 %v570, %v696
        %v698 = vpop.f32.mrb[0].mxu0
        %699 = vmatprep.mubr.bf16.mxu0 0
        %700 = vmatmul.mubr.bf16.gmra.mrb[0].mxu0 %v614
        %v701 = vpop.f32.mrb[0].mxu0
        %v702 = vadd.f32 %v570, %v701
        %v703 = vpop.f32.mrb[0].mxu0
        %v704 = vpop.f32.mrb[0].mxu0
        %v705 = vadd.f32 %v570, %v704
        %v706 = vpop.f32.mrb[0].mxu0
        %707 = vmatprep.mubr.bf16.mxu0 0
        %708 = vmatmul.mubr.bf16.gmra.mrb[0].mxu0 %v617
        %v709 = vpop.f32.mrb[0].mxu0
        %v710 = vadd.f32 %v570, %v709
        %v711 = vpop.f32.mrb[0].mxu0
        %v712 = vpop.f32.mrb[0].mxu0
        %v713 = vadd.f32 %v570, %v712
        %v714 = vpop.f32.mrb[0].mxu0
        %715 = vdwg.mxu0
        %732 = vrot.lane.b32.xlu0 %v654, 120
        %v733 = vpop.permute.xlu0 %732
        %734 = vrot.lane.b32.xlu0 %v657, 120
        %v735 = vpop.permute.xlu0 %734
        %736 = vrot.lane.b32.xlu0 %v662, 120
        %v737 = vpop.permute.xlu0 %736
        %738 = vrot.lane.b32.xlu0 %v665, 120
        %v739 = vpop.permute.xlu0 %738
        %740 = vrot.lane.b32.xlu0 %v670, 120
        %v741 = vpop.permute.xlu0 %740
        %742 = vrot.lane.b32.xlu0 %v673, 120
        %v743 = vpop.permute.xlu0 %742
        %744 = vrot.lane.b32.xlu0 %v678, 120
        %v745 = vpop.permute.xlu0 %744
        %746 = vrot.lane.b32.xlu0 %v681, 120
        %v747 = vpop.permute.xlu0 %746
        %748 = vrot.lane.b32.xlu0 %v686, 120
        %v749 = vpop.permute.xlu0 %748
        %750 = vrot.lane.b32.xlu0 %v689, 120
        %v751 = vpop.permute.xlu0 %750
        %752 = vrot.lane.b32.xlu0 %v694, 120
        %v753 = vpop.permute.xlu0 %752
        %754 = vrot.lane.b32.xlu0 %v697, 120
        %v755 = vpop.permute.xlu0 %754
        %756 = vrot.lane.b32.xlu0 %v702, 120
        %v757 = vpop.permute.xlu0 %756
        %758 = vrot.lane.b32.xlu0 %v705, 120
        %v759 = vpop.permute.xlu0 %758
        %760 = vrot.lane.b32.xlu0 %v710, 120
        %v761 = vpop.permute.xlu0 %760
        %762 = vrot.lane.b32.xlu0 %v713, 120
        %v763 = vpop.permute.xlu0 %762
        %v780 = vrcp.pop %v733
        %v781 = vmul.f32 %v171, %v780
        %v782 = vrcp.pop %v735
        %v783 = vmul.f32 %v172, %v782
        %v784 = vrcp.pop %v737
        %v785 = vmul.f32 %v173, %v784
        %v786 = vrcp.pop %v739
        %v787 = vmul.f32 %v174, %v786
        %v788 = vrcp.pop %v741
        %v789 = vmul.f32 %v175, %v788
        %v790 = vrcp.pop %v743
        %v791 = vmul.f32 %v176, %v790
        %v792 = vrcp.pop %v745
        %v793 = vmul.f32 %v177, %v792
        %v794 = vrcp.pop %v747
        %v795 = vmul.f32 %v178, %v794
        %v796 = vrcp.pop %v749
        %v797 = vmul.f32 %v179, %v796
        %v798 = vrcp.pop %v751
        %v799 = vmul.f32 %v180, %v798
        %v800 = vrcp.pop %v753
        %v801 = vmul.f32 %v181, %v800
        %v802 = vrcp.pop %v755
        %v803 = vmul.f32 %v182, %v802
        %v804 = vrcp.pop %v757
        %v805 = vmul.f32 %v183, %v804
        %v806 = vrcp.pop %v759
        %v807 = vmul.f32 %v184, %v806
        %v808 = vrcp.pop %v761
        %v809 = vmul.f32 %v185, %v808
        %v810 = vrcp.pop %v763
        %v811 = vmul.f32 %v186, %v810
        %v812 = vld [vmem:[%s1 + $0x60] sm:$0xf]
        %v813 = vld [vmem:[%s1 + $0x64] sm:$0xf]
        %v814 = vld [vmem:[%s1 + $0x68] sm:$0xf]
        %v815 = vld [vmem:[%s1 + $0x6c] sm:$0xf]
        %v816 = vld [vmem:[%s1 + $0x70] sm:$0xf]
        %v817 = vld [vmem:[%s1 + $0x74] sm:$0xf]
        %v818 = vld [vmem:[%s1 + $0x78] sm:$0xf]
        %v819 = vld [vmem:[%s1 + $0x7c] sm:$0xf]
        %v820 = vpack.c.bf16 %v657, %v654
        %v821 = vpack.c.bf16 %v665, %v662
        %v822 = vpack.c.bf16 %v673, %v670
        %v823 = vpack.c.bf16 %v681, %v678
        %v824 = vpack.c.bf16 %v689, %v686
        %v825 = vpack.c.bf16 %v697, %v694
        %v826 = vpack.c.bf16 %v705, %v702
        %v827 = vpack.c.bf16 %v713, %v710
        %v828 = vld [vmem:[%s1 + $0x80] sm:$0xf]
        %v829 = vld [vmem:[%s1 + $0x84] sm:$0xf]
        %v830 = vld [vmem:[%s1 + $0x88] sm:$0xf]
        %v831 = vld [vmem:[%s1 + $0x8c] sm:$0xf]
        %v832 = vld [vmem:[%s1 + $0x90] sm:$0xf]
        %v833 = vld [vmem:[%s1 + $0x94] sm:$0xf]
        %v834 = vld [vmem:[%s1 + $0x98] sm:$0xf]
        %v835 = vld [vmem:[%s1 + $0x9c] sm:$0xf]
        %v844 = vunpack.c.l.b16 %v828
        %v845 = vunpack.c.l.b16 %v829
        %v846 = vunpack.c.l.b16 %v830
        %v847 = vunpack.c.l.b16 %v831
        %v848 = vunpack.c.l.b16 %v832
        %v849 = vunpack.c.l.b16 %v833
        %v850 = vunpack.c.l.b16 %v834
        %v851 = vunpack.c.l.b16 %v835
        %v852 = vpack.c.b16 %v845, %v844
        %v853 = vpack.c.b16 %v847, %v846
        %v854 = vpack.c.b16 %v849, %v848
        %v855 = vpack.c.b16 %v851, %v850
        %v861 = vsel %vm232, %v820, 0
        %v864 = vsel %vm232, %v821, 0
        %v867 = vsel %vm232, %v822, 0
        %v870 = vsel %vm232, %v823, 0
        %v873 = vsel %vm232, %v824, 0
        %v876 = vsel %vm232, %v825, 0
        %v879 = vsel %vm232, %v826, 0
        %v882 = vsel %vm232, %v827, 0
        %884 = vmatprep.subr.bf16.mxu0 0
        %885 = vmatpush1.bf16.msra.mxu0 %v852
        %886 = vmatprep.subr.bf16.mxu0 0
        %887 = vmatpush1.bf16.msra.mxu0 %v853
        %888 = vmatprep.subr.bf16.mxu0 0
        %889 = vmatpush1.bf16.msra.mxu0 %v854
        %890 = vmatprep.subr.bf16.mxu0 0
        %891 = vmatpush1.bf16.msra.mxu0 %v855
        %892 = vmatprep.subr.bf16.mxu0 0
        %893 = vmatpush1.bf16.msra.mxu0 0
        %894 = vmatprep.subr.bf16.mxu0 0
        %895 = vmatpush1.bf16.msra.mxu0 0
        %896 = vmatprep.subr.bf16.mxu0 0
        %897 = vmatpush1.bf16.msra.mxu0 0
        %898 = vmatprep.subr.bf16.mxu0 0
        %899 = vmatpush1.bf16.msra.mxu0 0
        %900 = vmatprep.subr.bf16.mxu0 0
        %901 = vmatpush1.bf16.msra.mxu0 0
        %902 = vmatprep.subr.bf16.mxu0 0
        %903 = vmatpush1.bf16.msra.mxu0 0
        %904 = vmatprep.subr.bf16.mxu0 0
        %905 = vmatpush1.bf16.msra.mxu0 0
        %906 = vmatprep.subr.bf16.mxu0 0
        %907 = vmatpush1.bf16.msra.mxu0 0
        %908 = vmatprep.subr.bf16.mxu0 0
        %909 = vmatpush1.bf16.msra.mxu0 0
        %910 = vmatprep.subr.bf16.mxu0 0
        %911 = vmatpush1.bf16.msra.mxu0 0
        %912 = vmatprep.subr.bf16.mxu0 0
        %913 = vmatpush1.bf16.msra.mxu0 0
        %914 = vmatprep.subr.bf16.mxu0 0
        %915 = vmatpush1.bf16.msra.mxu0 0
        %916 = vmatprep.mubr.bf16.mxu0 0
        %917 = vmatmul.mubr.bf16.gmra.mrb[0].mxu0 %v861
        %v918 = vpop.f32.mrb[0].mxu0
        %v919 = vadd.f32 0.0, %v918
        %v920 = vpop.f32.mrb[0].mxu0
        %v921 = vpop.f32.mrb[0].mxu0
        %v922 = vadd.f32 0.0, %v921
        %v923 = vpop.f32.mrb[0].mxu0
        %924 = vmatprep.mubr.bf16.mxu0 0
        %925 = vmatmul.mubr.bf16.gmra.mrb[0].mxu0 %v864
        %v926 = vpop.f32.mrb[0].mxu0
        %v927 = vadd.f32 0.0, %v926
        %v928 = vpop.f32.mrb[0].mxu0
        %v929 = vpop.f32.mrb[0].mxu0
        %v930 = vadd.f32 0.0, %v929
        %v931 = vpop.f32.mrb[0].mxu0
        %932 = vmatprep.mubr.bf16.mxu0 0
        %933 = vmatmul.mubr.bf16.gmra.mrb[0].mxu0 %v867
        %v934 = vpop.f32.mrb[0].mxu0
        %v935 = vadd.f32 0.0, %v934
        %v936 = vpop.f32.mrb[0].mxu0
        %v937 = vpop.f32.mrb[0].mxu0
        %v938 = vadd.f32 0.0, %v937
        %v939 = vpop.f32.mrb[0].mxu0
        %940 = vmatprep.mubr.bf16.mxu0 0
        %941 = vmatmul.mubr.bf16.gmra.mrb[0].mxu0 %v870
        %v942 = vpop.f32.mrb[0].mxu0
        %v943 = vadd.f32 0.0, %v942
        %v944 = vpop.f32.mrb[0].mxu0
        %v945 = vpop.f32.mrb[0].mxu0
        %v946 = vadd.f32 0.0, %v945
        %v947 = vpop.f32.mrb[0].mxu0
        %948 = vmatprep.mubr.bf16.mxu0 0
        %949 = vmatmul.mubr.bf16.gmra.mrb[0].mxu0 %v873
        %v950 = vpop.f32.mrb[0].mxu0
        %v951 = vadd.f32 0.0, %v950
        %v952 = vpop.f32.mrb[0].mxu0
        %v953 = vpop.f32.mrb[0].mxu0
        %v954 = vadd.f32 0.0, %v953
        %v955 = vpop.f32.mrb[0].mxu0
        %956 = vmatprep.mubr.bf16.mxu0 0
        %957 = vmatmul.mubr.bf16.gmra.mrb[0].mxu0 %v876
        %v958 = vpop.f32.mrb[0].mxu0
        %v959 = vadd.f32 0.0, %v958
        %v960 = vpop.f32.mrb[0].mxu0
        %v961 = vpop.f32.mrb[0].mxu0
        %v962 = vadd.f32 0.0, %v961
        %v963 = vpop.f32.mrb[0].mxu0
        %964 = vmatprep.mubr.bf16.mxu0 0
        %965 = vmatmul.mubr.bf16.gmra.mrb[0].mxu0 %v879
        %v966 = vpop.f32.mrb[0].mxu0
        %v967 = vadd.f32 0.0, %v966
        %v968 = vpop.f32.mrb[0].mxu0
        %v969 = vpop.f32.mrb[0].mxu0
        %v970 = vadd.f32 0.0, %v969
        %v971 = vpop.f32.mrb[0].mxu0
        %972 = vmatprep.mubr.bf16.mxu0 0
        %973 = vmatmul.mubr.bf16.gmra.mrb[0].mxu0 %v882
        %v974 = vpop.f32.mrb[0].mxu0
        %v975 = vadd.f32 0.0, %v974
        %v976 = vpop.f32.mrb[0].mxu0
        %v977 = vpop.f32.mrb[0].mxu0
        %v978 = vadd.f32 0.0, %v977
        %v979 = vpop.f32.mrb[0].mxu0
        %980 = vdwg.mxu0
        %v989 = vunpack.c.l.b16 %v812
        %v990 = vunpack.c.l.b16 %v813
        %v991 = vunpack.c.l.b16 %v814
        %v992 = vunpack.c.l.b16 %v815
        %v993 = vunpack.c.l.b16 %v816
        %v994 = vunpack.c.l.b16 %v817
        %v995 = vunpack.c.l.b16 %v818
        %v996 = vunpack.c.l.b16 %v819
        %v997 = vpack.c.b16 %v990, %v989
        %v998 = vpack.c.b16 %v992, %v991
        %v999 = vpack.c.b16 %v994, %v993
        %v1000 = vpack.c.b16 %v996, %v995
        %1005 = vmatprep.subr.bf16.mxu0 0
        %1006 = vmatpush1.bf16.msra.mxu0 %v997
        %1007 = vmatprep.subr.bf16.mxu0 0
        %1008 = vmatpush1.bf16.msra.mxu0 %v998
        %1009 = vmatprep.subr.bf16.mxu0 0
        %1010 = vmatpush1.bf16.msra.mxu0 %v999
        %1011 = vmatprep.subr.bf16.mxu0 0
        %1012 = vmatpush1.bf16.msra.mxu0 %v1000
        %1013 = vmatprep.subr.bf16.mxu0 0
        %1014 = vmatpush1.bf16.msra.mxu0 0
        %1015 = vmatprep.subr.bf16.mxu0 0
        %1016 = vmatpush1.bf16.msra.mxu0 0
        %1017 = vmatprep.subr.bf16.mxu0 0
        %1018 = vmatpush1.bf16.msra.mxu0 0
        %1019 = vmatprep.subr.bf16.mxu0 0
        %1020 = vmatpush1.bf16.msra.mxu0 0
        %1021 = vmatprep.subr.bf16.mxu0 0
        %1022 = vmatpush1.bf16.msra.mxu0 0
        %1023 = vmatprep.subr.bf16.mxu0 0
        %1024 = vmatpush1.bf16.msra.mxu0 0
        %1025 = vmatprep.subr.bf16.mxu0 0
        %1026 = vmatpush1.bf16.msra.mxu0 0
        %1027 = vmatprep.subr.bf16.mxu0 0
        %1028 = vmatpush1.bf16.msra.mxu0 0
        %1029 = vmatprep.subr.bf16.mxu0 0
        %1030 = vmatpush1.bf16.msra.mxu0 0
        %1031 = vmatprep.subr.bf16.mxu0 0
        %1032 = vmatpush1.bf16.msra.mxu0 0
        %1033 = vmatprep.subr.bf16.mxu0 0
        %1034 = vmatpush1.bf16.msra.mxu0 0
        %1035 = vmatprep.subr.bf16.mxu0 0
        %1036 = vmatpush1.bf16.msra.mxu0 0
        %1037 = vmatprep.mubr.bf16.mxu0 0
        %1038 = vmatmul.mubr.bf16.gmra.mrb[0].mxu0 %v234
        %v1039 = vpop.f32.mrb[0].mxu0
        %v1040 = vadd.f32 %v919, %v1039
        %v1041 = vpop.f32.mrb[0].mxu0
        %v1042 = vpop.f32.mrb[0].mxu0
        %v1043 = vadd.f32 %v922, %v1042
        %v1044 = vpop.f32.mrb[0].mxu0
        %1045 = vmatprep.mubr.bf16.mxu0 0
        %1046 = vmatmul.mubr.bf16.gmra.mrb[0].mxu0 %v237
        %v1047 = vpop.f32.mrb[0].mxu0
        %v1048 = vadd.f32 %v927, %v1047
        %v1049 = vpop.f32.mrb[0].mxu0
        %v1050 = vpop.f32.mrb[0].mxu0
        %v1051 = vadd.f32 %v930, %v1050
        %v1052 = vpop.f32.mrb[0].mxu0
        %1053 = vmatprep.mubr.bf16.mxu0 0
        %1054 = vmatmul.mubr.bf16.gmra.mrb[0].mxu0 %v240
        %v1055 = vpop.f32.mrb[0].mxu0
        %v1056 = vadd.f32 %v935, %v1055
        %v1057 = vpop.f32.mrb[0].mxu0
        %v1058 = vpop.f32.mrb[0].mxu0
        %v1059 = vadd.f32 %v938, %v1058
        %v1060 = vpop.f32.mrb[0].mxu0
        %1061 = vmatprep.mubr.bf16.mxu0 0
        %1062 = vmatmul.mubr.bf16.gmra.mrb[0].mxu0 %v243
        %v1063 = vpop.f32.mrb[0].mxu0
        %v1064 = vadd.f32 %v943, %v1063
        %v1065 = vpop.f32.mrb[0].mxu0
        %v1066 = vpop.f32.mrb[0].mxu0
        %v1067 = vadd.f32 %v946, %v1066
        %v1068 = vpop.f32.mrb[0].mxu0
        %1069 = vmatprep.mubr.bf16.mxu0 0
        %1070 = vmatmul.mubr.bf16.gmra.mrb[0].mxu0 %v246
        %v1071 = vpop.f32.mrb[0].mxu0
        %v1072 = vadd.f32 %v951, %v1071
        %v1073 = vpop.f32.mrb[0].mxu0
        %v1074 = vpop.f32.mrb[0].mxu0
        %v1075 = vadd.f32 %v954, %v1074
        %v1076 = vpop.f32.mrb[0].mxu0
        %1077 = vmatprep.mubr.bf16.mxu0 0
        %1078 = vmatmul.mubr.bf16.gmra.mrb[0].mxu0 %v249
        %v1079 = vpop.f32.mrb[0].mxu0
        %v1080 = vadd.f32 %v959, %v1079
        %v1081 = vpop.f32.mrb[0].mxu0
        %v1082 = vpop.f32.mrb[0].mxu0
        %v1083 = vadd.f32 %v962, %v1082
        %v1084 = vpop.f32.mrb[0].mxu0
        %1085 = vmatprep.mubr.bf16.mxu0 0
        %1086 = vmatmul.mubr.bf16.gmra.mrb[0].mxu0 %v252
        %v1087 = vpop.f32.mrb[0].mxu0
        %v1088 = vadd.f32 %v967, %v1087
        %v1089 = vpop.f32.mrb[0].mxu0
        %v1090 = vpop.f32.mrb[0].mxu0
        %v1091 = vadd.f32 %v970, %v1090
        %v1092 = vpop.f32.mrb[0].mxu0
        %1093 = vmatprep.mubr.bf16.mxu0 0
        %1094 = vmatmul.mubr.bf16.gmra.mrb[0].mxu0 %v255
        %v1095 = vpop.f32.mrb[0].mxu0
        %v1096 = vadd.f32 %v975, %v1095
        %v1097 = vpop.f32.mrb[0].mxu0
        %v1098 = vpop.f32.mrb[0].mxu0
        %v1099 = vadd.f32 %v978, %v1098
        %v1100 = vpop.f32.mrb[0].mxu0
        %1101 = vdwg.mxu0
        %1103 = vset.pattern.permute.xlu0 0
        %1104 = vperm.xlu0 %1103, %v781
        %v1105 = vpop.permute.xlu0 %1104
        %1108 = vset.pattern.permute.xlu0 0
        %1109 = vperm.xlu0 %1108, %v783
        %v1110 = vpop.permute.xlu0 %1109
        %1113 = vset.pattern.permute.xlu0 0
        %1114 = vperm.xlu0 %1113, %v785
        %v1115 = vpop.permute.xlu0 %1114
        %1118 = vset.pattern.permute.xlu0 0
        %1119 = vperm.xlu0 %1118, %v787
        %v1120 = vpop.permute.xlu0 %1119
        %1123 = vset.pattern.permute.xlu0 0
        %1124 = vperm.xlu0 %1123, %v789
        %v1125 = vpop.permute.xlu0 %1124
        %1128 = vset.pattern.permute.xlu0 0
        %1129 = vperm.xlu0 %1128, %v791
        %v1130 = vpop.permute.xlu0 %1129
        %1133 = vset.pattern.permute.xlu0 0
        %1134 = vperm.xlu0 %1133, %v793
        %v1135 = vpop.permute.xlu0 %1134
        %1138 = vset.pattern.permute.xlu0 0
        %1139 = vperm.xlu0 %1138, %v795
        %v1140 = vpop.permute.xlu0 %1139
        %1143 = vset.pattern.permute.xlu0 0
        %1144 = vperm.xlu0 %1143, %v797
        %v1145 = vpop.permute.xlu0 %1144
        %1148 = vset.pattern.permute.xlu0 0
        %1149 = vperm.xlu0 %1148, %v799
        %v1150 = vpop.permute.xlu0 %1149
        %1153 = vset.pattern.permute.xlu0 0
        %1154 = vperm.xlu0 %1153, %v801
        %v1155 = vpop.permute.xlu0 %1154
        %1158 = vset.pattern.permute.xlu0 0
        %1159 = vperm.xlu0 %1158, %v803
        %v1160 = vpop.permute.xlu0 %1159
        %1163 = vset.pattern.permute.xlu0 0
        %1164 = vperm.xlu0 %1163, %v805
        %v1165 = vpop.permute.xlu0 %1164
        %1168 = vset.pattern.permute.xlu0 0
        %1169 = vperm.xlu0 %1168, %v807
        %v1170 = vpop.permute.xlu0 %1169
        %1173 = vset.pattern.permute.xlu0 0
        %1174 = vperm.xlu0 %1173, %v809
        %v1175 = vpop.permute.xlu0 %1174
        %1178 = vset.pattern.permute.xlu0 0
        %1179 = vperm.xlu0 %1178, %v811
        %v1180 = vpop.permute.xlu0 %1179
        %v1182 = vlaneseq
        %v1183 = vshrl.u32 %v1182, 7
        %v1184 = vsub.s32 4, %v1183
        %v1185 = vrot.slane %v195, %v1184
        %v1186 = vmul.f32 %v1105, %v1185
        %v1187 = vmul.f32 %v1110, %v1185
        %v1188 = vmul.f32 %v1115, %v1185
        %v1189 = vmul.f32 %v1120, %v1185
        %v1190 = vmul.f32 %v1125, %v1185
        %v1191 = vmul.f32 %v1130, %v1185
        %v1192 = vmul.f32 %v1135, %v1185
        %v1193 = vmul.f32 %v1140, %v1185
        %v1194 = vmul.f32 %v1145, %v1185
        %v1195 = vmul.f32 %v1150, %v1185
        %v1196 = vmul.f32 %v1155, %v1185
        %v1197 = vmul.f32 %v1160, %v1185
        %v1198 = vmul.f32 %v1165, %v1185
        %v1199 = vmul.f32 %v1170, %v1185
        %v1200 = vmul.f32 %v1175, %v1185
        %v1201 = vmul.f32 %v1180, %v1185
        %v1202 = vadd.f32 %v1040, %v1186
        %v1203 = vadd.f32 %v1043, %v1187
        %v1204 = vadd.f32 %v1048, %v1188
        %v1205 = vadd.f32 %v1051, %v1189
        %v1206 = vadd.f32 %v1056, %v1190
        %v1207 = vadd.f32 %v1059, %v1191
        %v1208 = vadd.f32 %v1064, %v1192
        %v1209 = vadd.f32 %v1067, %v1193
        %v1210 = vadd.f32 %v1072, %v1194
        %v1211 = vadd.f32 %v1075, %v1195
        %v1212 = vadd.f32 %v1080, %v1196
        %v1213 = vadd.f32 %v1083, %v1197
        %v1214 = vadd.f32 %v1088, %v1198
        %v1215 = vadd.f32 %v1091, %v1199
        %v1216 = vadd.f32 %v1096, %v1200
        %v1217 = vadd.f32 %v1099, %v1201
        %v1218 = vlaneseq
        %v1219 = vshrl.u32 %v1218, 7
        %v1220 = vsub.s32 3, %v1219
        %v1221 = vrot.slane %v195, %v1220
        %v1222 = vadd.f32 %v1202, %v1221
        %v1223 = vadd.f32 %v1203, %v1221
        %v1224 = vadd.f32 %v1204, %v1221
        %v1225 = vadd.f32 %v1205, %v1221
        %v1226 = vadd.f32 %v1206, %v1221
        %v1227 = vadd.f32 %v1207, %v1221
        %v1228 = vadd.f32 %v1208, %v1221
        %v1229 = vadd.f32 %v1209, %v1221
        %v1230 = vadd.f32 %v1210, %v1221
        %v1231 = vadd.f32 %v1211, %v1221
        %v1232 = vadd.f32 %v1212, %v1221
        %v1233 = vadd.f32 %v1213, %v1221
        %v1234 = vadd.f32 %v1214, %v1221
        %v1235 = vadd.f32 %v1215, %v1221
        %v1236 = vadd.f32 %v1216, %v1221
        %v1237 = vadd.f32 %v1217, %v1221
        %v1238 = vmax.f32 %v1222, 0.0
        %v1239 = vmax.f32 %v1223, 0.0
        %v1240 = vmax.f32 %v1224, 0.0
        %v1241 = vmax.f32 %v1225, 0.0
        %v1242 = vmax.f32 %v1226, 0.0
        %v1243 = vmax.f32 %v1227, 0.0
        %v1244 = vmax.f32 %v1228, 0.0
        %v1245 = vmax.f32 %v1229, 0.0
        %v1246 = vmax.f32 %v1230, 0.0
        %v1247 = vmax.f32 %v1231, 0.0
        %v1248 = vmax.f32 %v1232, 0.0
        %v1249 = vmax.f32 %v1233, 0.0
        %v1250 = vmax.f32 %v1234, 0.0
        %v1251 = vmax.f32 %v1235, 0.0
        %v1252 = vmax.f32 %v1236, 0.0
        %v1253 = vmax.f32 %v1237, 0.0
        %v1254 = vpack.c.bf16 %v1239, %v1238
        %v1255 = vpack.c.bf16 %v1241, %v1240
        %v1256 = vpack.c.bf16 %v1243, %v1242
        %v1257 = vpack.c.bf16 %v1245, %v1244
        %v1258 = vpack.c.bf16 %v1247, %v1246
        %v1259 = vpack.c.bf16 %v1249, %v1248
        %v1260 = vpack.c.bf16 %v1251, %v1250
        %v1261 = vpack.c.bf16 %v1253, %v1252
        %v1262 = vld [vmem:[%s1 + $0xa0] sm:$0xf]
        %v1263 = vld [vmem:[%s1 + $0xa4] sm:$0xf]
        %v1264 = vld [vmem:[%s1 + $0xa8] sm:$0xf]
        %v1265 = vld [vmem:[%s1 + $0xac] sm:$0xf]
        %v1266 = vld [vmem:[%s1 + $0xb0] sm:$0xf]
        %v1267 = vld [vmem:[%s1 + $0xb4] sm:$0xf]
        %v1268 = vld [vmem:[%s1 + $0xb8] sm:$0xf]
        %v1269 = vld [vmem:[%s1 + $0xbc] sm:$0xf]
        %v1270 = vlaneseq
        %v1271 = vshrl.u32 %v1270, 7
        %v1272 = vsub.s32 5, %v1271
        %v1273 = vrot.slane %v195, %v1272
        %v1282 = vunpack.c.l.b16 %v1262
        %v1283 = vunpack.c.l.b16 %v1263
        %v1284 = vunpack.c.l.b16 %v1264
        %v1285 = vunpack.c.l.b16 %v1265
        %v1286 = vunpack.c.l.b16 %v1266
        %v1287 = vunpack.c.l.b16 %v1267
        %v1288 = vunpack.c.l.b16 %v1268
        %v1289 = vunpack.c.l.b16 %v1269
        %v1290 = vpack.c.b16 %v1283, %v1282
        %v1291 = vpack.c.b16 %v1285, %v1284
        %v1292 = vpack.c.b16 %v1287, %v1286
        %v1293 = vpack.c.b16 %v1289, %v1288
        %v1299 = vsel %vm232, %v1254, 0
        %v1302 = vsel %vm232, %v1255, 0
        %v1305 = vsel %vm232, %v1256, 0
        %v1308 = vsel %vm232, %v1257, 0
        %v1311 = vsel %vm232, %v1258, 0
        %v1314 = vsel %vm232, %v1259, 0
        %v1317 = vsel %vm232, %v1260, 0
        %v1320 = vsel %vm232, %v1261, 0
        %1322 = vmatprep.subr.bf16.mxu0 0
        %1323 = vmatpush1.bf16.msra.mxu0 %v1290
        %1324 = vmatprep.subr.bf16.mxu0 0
        %1325 = vmatpush1.bf16.msra.mxu0 %v1291
        %1326 = vmatprep.subr.bf16.mxu0 0
        %1327 = vmatpush1.bf16.msra.mxu0 %v1292
        %1328 = vmatprep.subr.bf16.mxu0 0
        %1329 = vmatpush1.bf16.msra.mxu0 %v1293
        %1330 = vmatprep.subr.bf16.mxu0 0
        %1331 = vmatpush1.bf16.msra.mxu0 0
        %1332 = vmatprep.subr.bf16.mxu0 0
        %1333 = vmatpush1.bf16.msra.mxu0 0
        %1334 = vmatprep.subr.bf16.mxu0 0
        %1335 = vmatpush1.bf16.msra.mxu0 0
        %1336 = vmatprep.subr.bf16.mxu0 0
        %1337 = vmatpush1.bf16.msra.mxu0 0
        %1338 = vmatprep.subr.bf16.mxu0 0
        %1339 = vmatpush1.bf16.msra.mxu0 0
        %1340 = vmatprep.subr.bf16.mxu0 0
        %1341 = vmatpush1.bf16.msra.mxu0 0
        %1342 = vmatprep.subr.bf16.mxu0 0
        %1343 = vmatpush1.bf16.msra.mxu0 0
        %1344 = vmatprep.subr.bf16.mxu0 0
        %1345 = vmatpush1.bf16.msra.mxu0 0
        %1346 = vmatprep.subr.bf16.mxu0 0
        %1347 = vmatpush1.bf16.msra.mxu0 0
        %1348 = vmatprep.subr.bf16.mxu0 0
        %1349 = vmatpush1.bf16.msra.mxu0 0
        %1350 = vmatprep.subr.bf16.mxu0 0
        %1351 = vmatpush1.bf16.msra.mxu0 0
        %1352 = vmatprep.subr.bf16.mxu0 0
        %1353 = vmatpush1.bf16.msra.mxu0 0
        %1354 = vmatprep.mubr.bf16.mxu0 0
        %1355 = vmatmul.mubr.bf16.gmra.mrb[0].mxu0 %v1299
        %v1356 = vpop.f32.mrb[0].mxu0
        %v1357 = vadd.f32 %v1273, %v1356
        %v1358 = vpop.f32.mrb[0].mxu0
        %v1359 = vpop.f32.mrb[0].mxu0
        %v1360 = vadd.f32 %v1273, %v1359
        %v1361 = vpop.f32.mrb[0].mxu0
        %1362 = vmatprep.mubr.bf16.mxu0 0
        %1363 = vmatmul.mubr.bf16.gmra.mrb[0].mxu0 %v1302
        %v1364 = vpop.f32.mrb[0].mxu0
        %v1365 = vadd.f32 %v1273, %v1364
        %v1366 = vpop.f32.mrb[0].mxu0
        %v1367 = vpop.f32.mrb[0].mxu0
        %v1368 = vadd.f32 %v1273, %v1367
        %v1369 = vpop.f32.mrb[0].mxu0
        %1370 = vmatprep.mubr.bf16.mxu0 0
        %1371 = vmatmul.mubr.bf16.gmra.mrb[0].mxu0 %v1305
        %v1372 = vpop.f32.mrb[0].mxu0
        %v1373 = vadd.f32 %v1273, %v1372
        %v1374 = vpop.f32.mrb[0].mxu0
        %v1375 = vpop.f32.mrb[0].mxu0
        %v1376 = vadd.f32 %v1273, %v1375
        %v1377 = vpop.f32.mrb[0].mxu0
        %1378 = vmatprep.mubr.bf16.mxu0 0
        %1379 = vmatmul.mubr.bf16.gmra.mrb[0].mxu0 %v1308
        %v1380 = vpop.f32.mrb[0].mxu0
        %v1381 = vadd.f32 %v1273, %v1380
        %v1382 = vpop.f32.mrb[0].mxu0
        %v1383 = vpop.f32.mrb[0].mxu0
        %v1384 = vadd.f32 %v1273, %v1383
        %v1385 = vpop.f32.mrb[0].mxu0
        %1386 = vmatprep.mubr.bf16.mxu0 0
        %1387 = vmatmul.mubr.bf16.gmra.mrb[0].mxu0 %v1311
        %v1388 = vpop.f32.mrb[0].mxu0
        %v1389 = vadd.f32 %v1273, %v1388
        %v1390 = vpop.f32.mrb[0].mxu0
        %v1391 = vpop.f32.mrb[0].mxu0
        %v1392 = vadd.f32 %v1273, %v1391
        %v1393 = vpop.f32.mrb[0].mxu0
        %1394 = vmatprep.mubr.bf16.mxu0 0
        %1395 = vmatmul.mubr.bf16.gmra.mrb[0].mxu0 %v1314
        %v1396 = vpop.f32.mrb[0].mxu0
        %v1397 = vadd.f32 %v1273, %v1396
        %v1398 = vpop.f32.mrb[0].mxu0
        %v1399 = vpop.f32.mrb[0].mxu0
        %v1400 = vadd.f32 %v1273, %v1399
        %v1401 = vpop.f32.mrb[0].mxu0
        %1402 = vmatprep.mubr.bf16.mxu0 0
        %1403 = vmatmul.mubr.bf16.gmra.mrb[0].mxu0 %v1317
        %v1404 = vpop.f32.mrb[0].mxu0
        %v1405 = vadd.f32 %v1273, %v1404
        %v1406 = vpop.f32.mrb[0].mxu0
        %v1407 = vpop.f32.mrb[0].mxu0
        %v1408 = vadd.f32 %v1273, %v1407
        %v1409 = vpop.f32.mrb[0].mxu0
        %1410 = vmatprep.mubr.bf16.mxu0 0
        %1411 = vmatmul.mubr.bf16.gmra.mrb[0].mxu0 %v1320
        %v1412 = vpop.f32.mrb[0].mxu0
        %v1413 = vadd.f32 %v1273, %v1412
        %v1414 = vpop.f32.mrb[0].mxu0
        %v1415 = vpop.f32.mrb[0].mxu0
        %v1416 = vadd.f32 %v1273, %v1415
        %v1417 = vpop.f32.mrb[0].mxu0
        %1418 = vdwg.mxu0
        %v1419 = vmax.f32 %v1357, 0.0
        %v1420 = vmax.f32 %v1360, 0.0
        %v1421 = vmax.f32 %v1365, 0.0
        %v1422 = vmax.f32 %v1368, 0.0
        %v1423 = vmax.f32 %v1373, 0.0
        %v1424 = vmax.f32 %v1376, 0.0
        %v1425 = vmax.f32 %v1381, 0.0
        %v1426 = vmax.f32 %v1384, 0.0
        %v1427 = vmax.f32 %v1389, 0.0
        %v1428 = vmax.f32 %v1392, 0.0
        %v1429 = vmax.f32 %v1397, 0.0
        %v1430 = vmax.f32 %v1400, 0.0
        %v1431 = vmax.f32 %v1405, 0.0
        %v1432 = vmax.f32 %v1408, 0.0
        %v1433 = vmax.f32 %v1413, 0.0
        %v1434 = vmax.f32 %v1416, 0.0
        %v1435 = vpack.c.bf16 %v1420, %v1419
        %v1436 = vpack.c.bf16 %v1422, %v1421
        %v1437 = vpack.c.bf16 %v1424, %v1423
        %v1438 = vpack.c.bf16 %v1426, %v1425
        %v1439 = vpack.c.bf16 %v1428, %v1427
        %v1440 = vpack.c.bf16 %v1430, %v1429
        %v1441 = vpack.c.bf16 %v1432, %v1431
        %v1442 = vpack.c.bf16 %v1434, %v1433
        %v1443 = vld [vmem:[%s1 + $0xc0] sm:$0xf]
        %v1444 = vld [vmem:[%s1 + $0xc4] sm:$0xf]
        %v1445 = vld [vmem:[%s1 + $0xc8] sm:$0xf]
        %v1446 = vld [vmem:[%s1 + $0xcc] sm:$0xf]
        %v1447 = vld [vmem:[%s1 + $0xd0] sm:$0xf]
        %v1448 = vld [vmem:[%s1 + $0xd4] sm:$0xf]
        %v1449 = vld [vmem:[%s1 + $0xd8] sm:$0xf]
        %v1450 = vld [vmem:[%s1 + $0xdc] sm:$0xf]
        %v1451 = vlaneseq
        %v1452 = vshrl.u32 %v1451, 7
        %v1453 = vsub.s32 6, %v1452
        %v1454 = vrot.slane %v195, %v1453
        %v1463 = vunpack.c.l.b16 %v1443
        %v1464 = vunpack.c.l.b16 %v1444
        %v1465 = vunpack.c.l.b16 %v1445
        %v1466 = vunpack.c.l.b16 %v1446
        %v1467 = vunpack.c.l.b16 %v1447
        %v1468 = vunpack.c.l.b16 %v1448
        %v1469 = vunpack.c.l.b16 %v1449
        %v1470 = vunpack.c.l.b16 %v1450
        %v1471 = vpack.c.b16 %v1464, %v1463
        %v1472 = vpack.c.b16 %v1466, %v1465
        %v1473 = vpack.c.b16 %v1468, %v1467
        %v1474 = vpack.c.b16 %v1470, %v1469
        %v1480 = vsel %vm232, %v1435, 0
        %v1483 = vsel %vm232, %v1436, 0
        %v1486 = vsel %vm232, %v1437, 0
        %v1489 = vsel %vm232, %v1438, 0
        %v1492 = vsel %vm232, %v1439, 0
        %v1495 = vsel %vm232, %v1440, 0
        %v1498 = vsel %vm232, %v1441, 0
        %v1501 = vsel %vm232, %v1442, 0
        %1503 = vmatprep.subr.bf16.mxu0 0
        %1504 = vmatpush1.bf16.msra.mxu0 %v1471
        %1505 = vmatprep.subr.bf16.mxu0 0
        %1506 = vmatpush1.bf16.msra.mxu0 %v1472
        %1507 = vmatprep.subr.bf16.mxu0 0
        %1508 = vmatpush1.bf16.msra.mxu0 %v1473
        %1509 = vmatprep.subr.bf16.mxu0 0
        %1510 = vmatpush1.bf16.msra.mxu0 %v1474
        %1511 = vmatprep.subr.bf16.mxu0 0
        %1512 = vmatpush1.bf16.msra.mxu0 0
        %1513 = vmatprep.subr.bf16.mxu0 0
        %1514 = vmatpush1.bf16.msra.mxu0 0
        %1515 = vmatprep.subr.bf16.mxu0 0
        %1516 = vmatpush1.bf16.msra.mxu0 0
        %1517 = vmatprep.subr.bf16.mxu0 0
        %1518 = vmatpush1.bf16.msra.mxu0 0
        %1519 = vmatprep.subr.bf16.mxu0 0
        %1520 = vmatpush1.bf16.msra.mxu0 0
        %1521 = vmatprep.subr.bf16.mxu0 0
        %1522 = vmatpush1.bf16.msra.mxu0 0
        %1523 = vmatprep.subr.bf16.mxu0 0
        %1524 = vmatpush1.bf16.msra.mxu0 0
        %1525 = vmatprep.subr.bf16.mxu0 0
        %1526 = vmatpush1.bf16.msra.mxu0 0
        %1527 = vmatprep.subr.bf16.mxu0 0
        %1528 = vmatpush1.bf16.msra.mxu0 0
        %1529 = vmatprep.subr.bf16.mxu0 0
        %1530 = vmatpush1.bf16.msra.mxu0 0
        %1531 = vmatprep.subr.bf16.mxu0 0
        %1532 = vmatpush1.bf16.msra.mxu0 0
        %1533 = vmatprep.subr.bf16.mxu0 0
        %1534 = vmatpush1.bf16.msra.mxu0 0
        %1535 = vmatprep.mubr.bf16.mxu0 0
        %1536 = vmatmul.mubr.bf16.gmra.mrb[0].mxu0 %v1480
        %v1537 = vpop.f32.mrb[0].mxu0
        %v1538 = vadd.f32 %v1454, %v1537
        %v1539 = vpop.f32.mrb[0].mxu0
        %v1540 = vpop.f32.mrb[0].mxu0
        %v1541 = vadd.f32 %v1454, %v1540
        %v1542 = vpop.f32.mrb[0].mxu0
        %1543 = vmatprep.mubr.bf16.mxu0 0
        %1544 = vmatmul.mubr.bf16.gmra.mrb[0].mxu0 %v1483
        %v1545 = vpop.f32.mrb[0].mxu0
        %v1546 = vadd.f32 %v1454, %v1545
        %v1547 = vpop.f32.mrb[0].mxu0
        %v1548 = vpop.f32.mrb[0].mxu0
        %v1549 = vadd.f32 %v1454, %v1548
        %v1550 = vpop.f32.mrb[0].mxu0
        %1551 = vmatprep.mubr.bf16.mxu0 0
        %1552 = vmatmul.mubr.bf16.gmra.mrb[0].mxu0 %v1486
        %v1553 = vpop.f32.mrb[0].mxu0
        %v1554 = vadd.f32 %v1454, %v1553
        %v1555 = vpop.f32.mrb[0].mxu0
        %v1556 = vpop.f32.mrb[0].mxu0
        %v1557 = vadd.f32 %v1454, %v1556
        %v1558 = vpop.f32.mrb[0].mxu0
        %1559 = vmatprep.mubr.bf16.mxu0 0
        %1560 = vmatmul.mubr.bf16.gmra.mrb[0].mxu0 %v1489
        %v1561 = vpop.f32.mrb[0].mxu0
        %v1562 = vadd.f32 %v1454, %v1561
        %v1563 = vpop.f32.mrb[0].mxu0
        %v1564 = vpop.f32.mrb[0].mxu0
        %v1565 = vadd.f32 %v1454, %v1564
        %v1566 = vpop.f32.mrb[0].mxu0
        %1567 = vmatprep.mubr.bf16.mxu0 0
        %1568 = vmatmul.mubr.bf16.gmra.mrb[0].mxu0 %v1492
        %v1569 = vpop.f32.mrb[0].mxu0
        %v1570 = vadd.f32 %v1454, %v1569
        %v1571 = vpop.f32.mrb[0].mxu0
        %v1572 = vpop.f32.mrb[0].mxu0
        %v1573 = vadd.f32 %v1454, %v1572
        %v1574 = vpop.f32.mrb[0].mxu0
        %1575 = vmatprep.mubr.bf16.mxu0 0
        %1576 = vmatmul.mubr.bf16.gmra.mrb[0].mxu0 %v1495
        %v1577 = vpop.f32.mrb[0].mxu0
        %v1578 = vadd.f32 %v1454, %v1577
        %v1579 = vpop.f32.mrb[0].mxu0
        %v1580 = vpop.f32.mrb[0].mxu0
        %v1581 = vadd.f32 %v1454, %v1580
        %v1582 = vpop.f32.mrb[0].mxu0
        %1583 = vmatprep.mubr.bf16.mxu0 0
        %1584 = vmatmul.mubr.bf16.gmra.mrb[0].mxu0 %v1498
        %v1585 = vpop.f32.mrb[0].mxu0
        %v1586 = vadd.f32 %v1454, %v1585
        %v1587 = vpop.f32.mrb[0].mxu0
        %v1588 = vpop.f32.mrb[0].mxu0
        %v1589 = vadd.f32 %v1454, %v1588
        %v1590 = vpop.f32.mrb[0].mxu0
        %1591 = vmatprep.mubr.bf16.mxu0 0
        %1592 = vmatmul.mubr.bf16.gmra.mrb[0].mxu0 %v1501
        %v1593 = vpop.f32.mrb[0].mxu0
        %v1594 = vadd.f32 %v1454, %v1593
        %v1595 = vpop.f32.mrb[0].mxu0
        %v1596 = vpop.f32.mrb[0].mxu0
        %v1597 = vadd.f32 %v1454, %v1596
        %v1598 = vpop.f32.mrb[0].mxu0
        %1599 = vdwg.mxu0
        %v1600 = vmul.f32 %v654, %v1538
        %v1601 = vmul.f32 %v657, %v1541
        %v1602 = vmul.f32 %v662, %v1546
        %v1603 = vmul.f32 %v665, %v1549
        %v1604 = vmul.f32 %v670, %v1554
        %v1605 = vmul.f32 %v673, %v1557
        %v1606 = vmul.f32 %v678, %v1562
        %v1607 = vmul.f32 %v681, %v1565
        %v1608 = vmul.f32 %v686, %v1570
        %v1609 = vmul.f32 %v689, %v1573
        %v1610 = vmul.f32 %v694, %v1578
        %v1611 = vmul.f32 %v697, %v1581
        %v1612 = vmul.f32 %v702, %v1586
        %v1613 = vmul.f32 %v705, %v1589
        %v1614 = vmul.f32 %v710, %v1594
        %v1615 = vmul.f32 %v713, %v1597
        %1616 = vxpose.xlu0.b32.start [1/16] %v1600, 128
        %1617 = vxpose.xlu0.b32.cont [2/16] %v1601, 128
        %1618 = vxpose.xlu0.b32.cont [3/16] %v1602, 128
        %1619 = vxpose.xlu0.b32.cont [4/16] %v1603, 128
        %1620 = vxpose.xlu0.b32.cont [5/16] %v1604, 128
        %1621 = vxpose.xlu0.b32.cont [6/16] %v1605, 128
        %1622 = vxpose.xlu0.b32.cont [7/16] %v1606, 128
        %1623 = vxpose.xlu0.b32.cont [8/16] %v1607, 128
        %1624 = vxpose.xlu0.b32.cont [9/16] %v1608, 128
        %1625 = vxpose.xlu0.b32.cont [10/16] %v1609, 128
        %1626 = vxpose.xlu0.b32.cont [11/16] %v1610, 128
        %1627 = vxpose.xlu0.b32.cont [12/16] %v1611, 128
        %1628 = vxpose.xlu0.b32.cont [13/16] %v1612, 128
        %1629 = vxpose.xlu0.b32.cont [14/16] %v1613, 128
        %1630 = vxpose.xlu0.b32.cont [15/16] %v1614, 128
        %1631 = vxpose.xlu0.b32.end [16/16] %v1615, 128
        %v1632 = vpop.trf.xlu0
        %v1633 = vpop.trf.xlu0
        %v1634 = vpop.trf.xlu0
        %v1635 = vpop.trf.xlu0
        %v1636 = vpop.trf.xlu0
        %v1637 = vpop.trf.xlu0
        %v1638 = vpop.trf.xlu0
        %v1639 = vpop.trf.xlu0
        %v1640 = vpop.trf.xlu0
        %v1641 = vpop.trf.xlu0
        %v1642 = vpop.trf.xlu0
        %v1643 = vpop.trf.xlu0
        %v1644 = vpop.trf.xlu0
        %v1645 = vpop.trf.xlu0
        %v1646 = vpop.trf.xlu0
        %v1647 = vpop.trf.xlu0
        %v1648 = vadd.f32 %v1632, %v1633
        %v1649 = vadd.f32 %v1648, %v1634
        %v1650 = vadd.f32 %v1649, %v1635
        %v1651 = vadd.f32 %v1650, %v1636
        %v1652 = vadd.f32 %v1651, %v1637
        %v1653 = vadd.f32 %v1652, %v1638
        %v1654 = vadd.f32 %v1653, %v1639
        %v1655 = vrot.slane %v1654, 4
        %v1656 = vadd.f32 %v1654, %v1655
        %v1657 = vrot.slane %v1656, 2
        %v1658 = vadd.f32 %v1656, %v1657
        %v1659 = vrot.slane %v1658, 1
        %v1660 = vadd.f32 %v1658, %v1659
        %1661 = vst [vmem:[%s163] sm:$0x1] %v1660
        %s1662 = sand.u32 %s93, 1
        %s1663 = scalar_lea.sflag [#allocation3], %s1662
        %s1664 = sand.u32 %s93, 1
        %s1665 = scalar_lea.vmem [#allocation2], %s1664
        // Predicated region
        $region33: #{tpu_custom_call.1} parent=31 // pred_check
          %p1666 = pneg %p103
        $region34: #{tpu_custom_call.1} parent=31 // pred_check_branch
          %1668 = sbr.rel (%p1666) target = $region36
        $region35: #{tpu_custom_call.1} parent=31 // pred_region
          %s1670 = ssub.s32 16, 16
          %1671 = vsyncadd %s1663, %s1670
          %s1672 = smul.addr %s17, 16
          %s1673 = scalar_lea.hbm %s3, %s1672
          %s1675 = sshll.u32 %s1665, 4
          %s1676 = int_to_ptr.vmem [resolvable:$true] %s1675
          %1678 = dma.vmem_to_hbm [thread:$0]  %s1676, 16, %s1673, %s1663
        $region36: #{tpu_custom_call.1} parent=31 // pred_fallthru
          _
      $region32: #{tpu_custom_call.1} parent=5 // pred_fallthru
        _
      %p1679 = scmp.le.s32.totalorder 2, %s12
      // Predicated region
      $region37: #{tpu_custom_call.1} parent=5 // pred_check
        %p1680 = pneg %p1679
      $region38: #{tpu_custom_call.1} parent=5 // pred_check_branch
        %1682 = sbr.rel (%p1680) target = $region40
      $region39: #{tpu_custom_call.1} parent=5 // pred_region
        %s1683 = ssub.s32 %s12, 2
        // Predicated region
        $region41: #{tpu_custom_call.1} parent=39 // pred_check
          %p1684 = pneg %p109
        $region42: #{tpu_custom_call.1} parent=39 // pred_check_branch
          %1686 = sbr.rel (%p1684) target = $region44
        $region43: #{tpu_custom_call.1} parent=39 // pred_region
          %s1687 = sand.u32 %s94, 1
          %s1688 = scalar_lea.sflag [#allocation3], %s1687
          %s1689 = sand.u32 %s94, 1
          %s1690 = scalar_lea.vmem [#allocation2], %s1689
          %1691 = dma.done %s1688, 16
        $region44: #{tpu_custom_call.1} parent=39 // pred_fallthru
          _
      $region40: #{tpu_custom_call.1} parent=5 // pred_fallthru
        _
    $region6: #{tpu_custom_call.1} parent=1 // loop_footer
      %s16 = sadd.s32 1, %s12
    $region7: #{tpu_custom_call.1} parent=1 // loop_footer_branch
      %11 = sbr.rel target = $region3
    $region8: #{tpu_custom_call.1} parent=1 // loop_exit
      _
    %1692 = vsyncpa [#allocation3], 1
    %s1693 = scalar_lea.sflag [#allocation3], 1
    %1694 = vsyncpa %s1693, 1

</llo_original>
